<compile_context>
chip_gen: v7x
topology: tpu7x:2x2x1
jax: 0.10.0
libtpu: 0.0.40
codegen_flags: <defaults>
</compile_context>

<pallas_src>
import math

import jax
import jax.numpy as jnp
from jax import lax
from jax.experimental import pallas as pl
from jax.experimental.pallas import tpu as pltpu


def _lstm_select_kernel(x_ref, w_ih_t_ref, w_hh_t_ref, b_ref,
                        w_col_ref, b_sel_ref, out_ref, hs_scr):
    """LSTM recurrence with hoisted input projection and hoisted selected head.

    x_ref:       (T, B, Din)  time-major input
    w_ih_t_ref:  (Din, 4H)    input-to-hidden weights, gate-reordered [i|f|o|g], transposed
    w_hh_t_ref:  (H, 4H)      hidden-to-hidden weights, gate-reordered, transposed
    b_ref:       (1, 4H)      b_ih + b_hh, gate-reordered
    w_col_ref:   (H, 1)       output-head column for the selected feature only
    b_sel_ref:   (1, 1)       output-head bias for the selected feature
    out_ref:     (T, B, 1)    selected feature per timestep
    hs_scr:      (T, B, H)    VMEM scratch for hidden states (consumed post-loop)
    """
    T, B, Din = x_ref.shape
    H = w_hh_t_ref.shape[0]

    # ---- Hoisted input projection: no serial dependence, one big MXU matmul.
    x_flat = x_ref[...].reshape(T * B, Din)
    gates_x = (jnp.dot(x_flat, w_ih_t_ref[...],
                       preferred_element_type=jnp.float32)
               + b_ref[...])                                 # (T*B, 4H)
    gates_x = gates_x.reshape(T, B, 4 * H)

    w_hh_t = w_hh_t_ref[...]                                 # hoisted weight load

    h = jnp.zeros((B, H), jnp.float32)                       # state lives in vregs
    c = jnp.zeros((B, H), jnp.float32)

    # ---- Recurrence: short static trip count -> fully unrolled with static
    # indices (no dynamic slices; LLO can overlap MXU/EUP/VPU across steps).
    for t in range(T):
        gates = gates_x[t] + jnp.dot(h, w_hh_t,
                                     preferred_element_type=jnp.float32)  # (B, 4H)
        # Gate layout is [i | f | o | g] (reordered in the wrapper):
        # one sigmoid over 3H lanes + one tanh over H lanes.
        sig = jax.nn.sigmoid(gates[:, :3 * H])
        g_g = jnp.tanh(gates[:, 3 * H:])
        i_g = sig[:, 0:H]
        f_g = sig[:, H:2 * H]
        o_g = sig[:, 2 * H:3 * H]

        c = f_g * c + i_g * g_g
        h = o_g * jnp.tanh(c)
        hs_scr[t] = h

    # ---- Hoisted output head: one matmul against the single selected column,
    # then one bulk store (no per-step narrow masked stores).
    hs = hs_scr[...].reshape(T * B, H)
    y = (jnp.dot(hs, w_col_ref[...], preferred_element_type=jnp.float32)
         + b_sel_ref[...])                                   # (T*B, 1)
    out_ref[...] = y.reshape(T, B, 1)


def _gate_reorder(a, H):
    """Reorder PyTorch gate row-blocks [i, f, g, o] -> [i, f, o, g]."""
    parts = a.reshape((4, H) + a.shape[1:])
    return jnp.concatenate([parts[0], parts[1], parts[3], parts[2]], axis=0)


def lstm_select_feature(x, params, idx):
    """x: (B, T, Din) batch-first float32. Returns (B, T, 1)."""
    w_ih, w_hh, b_ih, b_hh, w_out, b_out = params
    B, T, Din = x.shape
    H = w_hh.shape[1]
    idx = int(idx)

    # Glue: layout plumbing only (transposes / gate reorder / head selection).
    x_tm = jnp.transpose(x, (1, 0, 2))                       # (T, B, Din)
    w_ih_t = _gate_reorder(w_ih, H).T                        # (Din, 4H)
    w_hh_t = _gate_reorder(w_hh, H).T                        # (H, 4H)
    b = _gate_reorder(b_ih + b_hh, H).reshape(1, 4 * H)      # (1, 4H)
    w_col = w_out[idx].reshape(H, 1)                         # (H, 1) selected column
    b_sel = b_out[idx].reshape(1, 1)                         # (1, 1)

    flops = (2 * T * B * 4 * H * (Din + H)    # input + hidden projections
             + 2 * T * B * H                  # head matmul (single column)
             + 12 * T * B * H)                # elementwise cell updates
    transcendentals = 5 * T * B * H           # sigmoid(3H) + tanh(H) + tanh(c)
    bytes_accessed = 4 * (x.size + w_ih_t.size + w_hh_t.size + b.size
                          + w_col.size + b_sel.size + T * B)

    vmem_spec = pl.BlockSpec(memory_space=pltpu.MemorySpace.VMEM)

    out_tm = pl.pallas_call(
        _lstm_select_kernel,
        out_shape=jax.ShapeDtypeStruct((T, B, 1), jnp.float32),
        in_specs=[vmem_spec] * 6,
        out_specs=vmem_spec,
        scratch_shapes=[
            pltpu.VMEM((T, B, H), jnp.float32),   # hidden-state stash
        ],
        cost_estimate=pl.CostEstimate(flops=flops,
                                      transcendentals=transcendentals,
                                      bytes_accessed=bytes_accessed),
    )(x_tm, w_ih_t, w_hh_t, b, w_col, b_sel)

    return jnp.transpose(out_tm, (1, 0, 2))                  # (B, T, 1)


def lstm_select_feature_ref(x, params, idx):
    """Pure-JAX reference (matches PyTorch nn.LSTM(batch_first) + Linear + select)."""
    w_ih, w_hh, b_ih, b_hh, w_out, b_out = params
    B, T, Din = x.shape
    H = w_hh.shape[1]

    def cell(carry, x_t):
        h, c = carry
        gates = x_t @ w_ih.T + h @ w_hh.T + b_ih + b_hh
        i = jax.nn.sigmoid(gates[:, :H])
        f = jax.nn.sigmoid(gates[:, H:2 * H])
        g = jnp.tanh(gates[:, 2 * H:3 * H])
        o = jax.nn.sigmoid(gates[:, 3 * H:])
        c = f * c + i * g
        h = o * jnp.tanh(c)
        return (h, c), h

    h0 = jnp.zeros((B, H), jnp.float32)
    c0 = jnp.zeros((B, H), jnp.float32)
    _, hs = lax.scan(cell, (h0, c0), jnp.transpose(x, (1, 0, 2)))
    hs = jnp.transpose(hs, (1, 0, 2))                        # (B, T, H)
    out = hs @ w_out.T + b_out                               # (B, T, F)
    return out[..., idx][..., None]                          # (B, T, 1)


if __name__ == "__main__":
    B, T, Din, H, F = 2, 8, 16, 32, 4
    idx = 2

    key = jax.random.PRNGKey(0)
    ks = jax.random.split(key, 7)
    scale = 1.0 / math.sqrt(H)
    # Deterministic synthetic parameters (PyTorch-style uniform init ranges).
    w_ih = jax.random.uniform(ks[0], (4 * H, Din), jnp.float32, -scale, scale)
    w_hh = jax.random.uniform(ks[1], (4 * H, H), jnp.float32, -scale, scale)
    b_ih = jax.random.uniform(ks[2], (4 * H,), jnp.float32, -scale, scale)
    b_hh = jax.random.uniform(ks[3], (4 * H,), jnp.float32, -scale, scale)
    w_out = jax.random.uniform(ks[4], (F, H), jnp.float32, -scale, scale)
    b_out = jax.random.uniform(ks[5], (F,), jnp.float32, -scale, scale)
    x = jax.random.normal(ks[6], (B, T, Din), jnp.float32)

    params = (w_ih, w_hh, b_ih, b_hh, w_out, b_out)

    out = jax.block_until_ready(lstm_select_feature(x, params, idx))
    ref = lstm_select_feature_ref(x, params, idx)

    assert out.shape == (B, T, 1), out.shape
    assert bool(jnp.all(jnp.isfinite(out)))
    assert bool(jnp.allclose(out, ref, atol=2e-3, rtol=2e-3)), (
        float(jnp.max(jnp.abs(out - ref))))

    print("KERNEL_OK")
</pallas_src>

<mosaic_0001>
module attributes {stable_mosaic.version = 11 : i64} {
  func.func @_lstm_select_kernel(%arg0: memref<8x2x16xf32, #tpu.memory_space<vmem>>, %arg1: memref<16x128xf32, #tpu.memory_space<vmem>>, %arg2: memref<32x128xf32, #tpu.memory_space<vmem>>, %arg3: memref<1x128xf32, #tpu.memory_space<vmem>>, %arg4: memref<32x1xf32, #tpu.memory_space<vmem>>, %arg5: memref<1x1xf32, #tpu.memory_space<vmem>>, %arg6: memref<8x2x1xf32, #tpu.memory_space<vmem>>, %arg7: memref<8x2x32xf32, #tpu.memory_space<vmem>>) attributes {dimension_semantics = [], scalar_prefetch = 0 : i64, scratch_operands = 1 : i64, tpu.core_type = #tpu.core_type<tc>} {
    %c0 = arith.constant 0 : index
    %c0_0 = arith.constant 0 : index
    %c0_1 = arith.constant 0 : index
    %0 = vector.load %arg0[%c0, %c0_0, %c0_1] : memref<8x2x16xf32, #tpu.memory_space<vmem>>, vector<8x2x16xf32>
    %1 = vector.shape_cast %0 : vector<8x2x16xf32> to vector<16x16xf32>
    %c0_2 = arith.constant 0 : index
    %c0_3 = arith.constant 0 : index
    %2 = vector.load %arg1[%c0_2, %c0_3] : memref<16x128xf32, #tpu.memory_space<vmem>>, vector<16x128xf32>
    %cst = arith.constant dense<0.000000e+00> : vector<16x128xf32>
    %3 = tpu.matmul %1, %2, %cst {dimension_numbers = #tpu.dot_dimension_numbers<[1], [0], [0], [1], [0, 0, 1, 1], [], []>} : vector<16x16xf32>, vector<16x128xf32>, vector<16x128xf32> -> vector<16x128xf32>
    %c0_4 = arith.constant 0 : index
    %c0_5 = arith.constant 0 : index
    %4 = vector.load %arg3[%c0_4, %c0_5] : memref<1x128xf32, #tpu.memory_space<vmem>>, vector<1x128xf32>
    %5 = vector.broadcast %4 : vector<1x128xf32> to vector<16x128xf32>
    %6 = arith.addf %3, %5 : vector<16x128xf32>
    %7 = vector.shape_cast %6 : vector<16x128xf32> to vector<8x2x128xf32>
    %c0_6 = arith.constant 0 : index
    %c0_7 = arith.constant 0 : index
    %8 = vector.load %arg2[%c0_6, %c0_7] : memref<32x128xf32, #tpu.memory_space<vmem>>, vector<32x128xf32>
    %cst_8 = arith.constant 0.000000e+00 : f32
    %9 = vector.broadcast %cst_8 : f32 to vector<2x32xf32>
    %cst_9 = arith.constant 0.000000e+00 : f32
    %10 = vector.broadcast %cst_9 : f32 to vector<2x32xf32>
    %11 = vector.extract_strided_slice %7 {offsets = [0, 0, 0], sizes = [1, 2, 128], strides = [1, 1, 1]} : vector<8x2x128xf32> to vector<1x2x128xf32>
    %12 = vector.shape_cast %11 : vector<1x2x128xf32> to vector<2x128xf32>
    %cst_10 = arith.constant dense<0.000000e+00> : vector<2x128xf32>
    %13 = tpu.matmul %9, %8, %cst_10 {dimension_numbers = #tpu.dot_dimension_numbers<[1], [0], [0], [1], [0, 0, 1, 1], [], []>} : vector<2x32xf32>, vector<32x128xf32>, vector<2x128xf32> -> vector<2x128xf32>
    %14 = arith.addf %12, %13 : vector<2x128xf32>
    %15 = vector.extract_strided_slice %14 {offsets = [0, 0], sizes = [2, 96], strides = [1, 1]} : vector<2x128xf32> to vector<2x96xf32>
    %16 = arith.negf %15 : vector<2x96xf32>
    %17 = math.exp %16 : vector<2x96xf32>
    %cst_11 = arith.constant 1.000000e+00 : f32
    %18 = vector.broadcast %cst_11 : f32 to vector<2x96xf32>
    %19 = arith.addf %18, %17 : vector<2x96xf32>
    %20 = arith.divf %18, %19 : vector<2x96xf32>
    %21 = vector.extract_strided_slice %14 {offsets = [0, 96], sizes = [2, 32], strides = [1, 1]} : vector<2x128xf32> to vector<2x32xf32>
    %22 = math.tanh %21 : vector<2x32xf32>
    %23 = vector.extract_strided_slice %20 {offsets = [0, 0], sizes = [2, 32], strides = [1, 1]} : vector<2x96xf32> to vector<2x32xf32>
    %24 = vector.extract_strided_slice %20 {offsets = [0, 32], sizes = [2, 32], strides = [1, 1]} : vector<2x96xf32> to vector<2x32xf32>
    %25 = vector.extract_strided_slice %20 {offsets = [0, 64], sizes = [2, 32], strides = [1, 1]} : vector<2x96xf32> to vector<2x32xf32>
    %26 = arith.mulf %24, %10 : vector<2x32xf32>
    %27 = arith.mulf %23, %22 : vector<2x32xf32>
    %28 = arith.addf %26, %27 : vector<2x32xf32>
    %29 = math.tanh %28 : vector<2x32xf32>
    %30 = arith.mulf %25, %29 : vector<2x32xf32>
    %c0_12 = arith.constant 0 : index
    %c0_13 = arith.constant 0 : index
    %c0_14 = arith.constant 0 : index
    %31 = vector.load %arg7[%c0_12, %c0_13, %c0_14] : memref<8x2x32xf32, #tpu.memory_space<vmem>>, vector<1x2x32xf32>
    %32 = vector.shape_cast %31 : vector<1x2x32xf32> to vector<2x32xf32>
    %33 = vector.shape_cast %30 : vector<2x32xf32> to vector<1x2x32xf32>
    tpu.vector_store %arg7[%c0_12, %c0_13, %c0_14], %33 {strides = array<i32>} : memref<8x2x32xf32, #tpu.memory_space<vmem>>, vector<1x2x32xf32>,
    %34 = vector.extract_strided_slice %7 {offsets = [1, 0, 0], sizes = [1, 2, 128], strides = [1, 1, 1]} : vector<8x2x128xf32> to vector<1x2x128xf32>
    %35 = vector.shape_cast %34 : vector<1x2x128xf32> to vector<2x128xf32>
    %cst_15 = arith.constant dense<0.000000e+00> : vector<2x128xf32>
    %36 = tpu.matmul %30, %8, %cst_15 {dimension_numbers = #tpu.dot_dimension_numbers<[1], [0], [0], [1], [0, 0, 1, 1], [], []>} : vector<2x32xf32>, vector<32x128xf32>, vector<2x128xf32> -> vector<2x128xf32>
    %37 = arith.addf %35, %36 : vector<2x128xf32>
    %38 = vector.extract_strided_slice %37 {offsets = [0, 0], sizes = [2, 96], strides = [1, 1]} : vector<2x128xf32> to vector<2x96xf32>
    %39 = arith.negf %38 : vector<2x96xf32>
    %40 = math.exp %39 : vector<2x96xf32>
    %cst_16 = arith.constant 1.000000e+00 : f32
    %41 = vector.broadcast %cst_16 : f32 to vector<2x96xf32>
    %42 = arith.addf %41, %40 : vector<2x96xf32>
    %43 = arith.divf %41, %42 : vector<2x96xf32>
    %44 = vector.extract_strided_slice %37 {offsets = [0, 96], sizes = [2, 32], strides = [1, 1]} : vector<2x128xf32> to vector<2x32xf32>
    %45 = math.tanh %44 : vector<2x32xf32>
    %46 = vector.extract_strided_slice %43 {offsets = [0, 0], sizes = [2, 32], strides = [1, 1]} : vector<2x96xf32> to vector<2x32xf32>
    %47 = vector.extract_strided_slice %43 {offsets = [0, 32], sizes = [2, 32], strides = [1, 1]} : vector<2x96xf32> to vector<2x32xf32>
    %48 = vector.extract_strided_slice %43 {offsets = [0, 64], sizes = [2, 32], strides = [1, 1]} : vector<2x96xf32> to vector<2x32xf32>
    %49 = arith.mulf %47, %28 : vector<2x32xf32>
    %50 = arith.mulf %46, %45 : vector<2x32xf32>
    %51 = arith.addf %49, %50 : vector<2x32xf32>
    %52 = math.tanh %51 : vector<2x32xf32>
    %53 = arith.mulf %48, %52 : vector<2x32xf32>
    %c1 = arith.constant 1 : index
    %c0_17 = arith.constant 0 : index
    %c0_18 = arith.constant 0 : index
    %54 = vector.load %arg7[%c1, %c0_17, %c0_18] : memref<8x2x32xf32, #tpu.memory_space<vmem>>, vector<1x2x32xf32>
    %55 = vector.shape_cast %54 : vector<1x2x32xf32> to vector<2x32xf32>
    %56 = vector.shape_cast %53 : vector<2x32xf32> to vector<1x2x32xf32>
    tpu.vector_store %arg7[%c1, %c0_17, %c0_18], %56 {strides = array<i32>} : memref<8x2x32xf32, #tpu.memory_space<vmem>>, vector<1x2x32xf32>,
    %57 = vector.extract_strided_slice %7 {offsets = [2, 0, 0], sizes = [1, 2, 128], strides = [1, 1, 1]} : vector<8x2x128xf32> to vector<1x2x128xf32>
    %58 = vector.shape_cast %57 : vector<1x2x128xf32> to vector<2x128xf32>
    %cst_19 = arith.constant dense<0.000000e+00> : vector<2x128xf32>
    %59 = tpu.matmul %53, %8, %cst_19 {dimension_numbers = #tpu.dot_dimension_numbers<[1], [0], [0], [1], [0, 0, 1, 1], [], []>} : vector<2x32xf32>, vector<32x128xf32>, vector<2x128xf32> -> vector<2x128xf32>
    %60 = arith.addf %58, %59 : vector<2x128xf32>
    %61 = vector.extract_strided_slice %60 {offsets = [0, 0], sizes = [2, 96], strides = [1, 1]} : vector<2x128xf32> to vector<2x96xf32>
    %62 = arith.negf %61 : vector<2x96xf32>
    %63 = math.exp %62 : vector<2x96xf32>
    %cst_20 = arith.constant 1.000000e+00 : f32
    %64 = vector.broadcast %cst_20 : f32 to vector<2x96xf32>
    %65 = arith.addf %64, %63 : vector<2x96xf32>
    %66 = arith.divf %64, %65 : vector<2x96xf32>
    %67 = vector.extract_strided_slice %60 {offsets = [0, 96], sizes = [2, 32], strides = [1, 1]} : vector<2x128xf32> to vector<2x32xf32>
    %68 = math.tanh %67 : vector<2x32xf32>
    %69 = vector.extract_strided_slice %66 {offsets = [0, 0], sizes = [2, 32], strides = [1, 1]} : vector<2x96xf32> to vector<2x32xf32>
    %70 = vector.extract_strided_slice %66 {offsets = [0, 32], sizes = [2, 32], strides = [1, 1]} : vector<2x96xf32> to vector<2x32xf32>
    %71 = vector.extract_strided_slice %66 {offsets = [0, 64], sizes = [2, 32], strides = [1, 1]} : vector<2x96xf32> to vector<2x32xf32>
    %72 = arith.mulf %70, %51 : vector<2x32xf32>
    %73 = arith.mulf %69, %68 : vector<2x32xf32>
    %74 = arith.addf %72, %73 : vector<2x32xf32>
    %75 = math.tanh %74 : vector<2x32xf32>
    %76 = arith.mulf %71, %75 : vector<2x32xf32>
    %c2 = arith.constant 2 : index
    %c0_21 = arith.constant 0 : index
    %c0_22 = arith.constant 0 : index
    %77 = vector.load %arg7[%c2, %c0_21, %c0_22] : memref<8x2x32xf32, #tpu.memory_space<vmem>>, vector<1x2x32xf32>
    %78 = vector.shape_cast %77 : vector<1x2x32xf32> to vector<2x32xf32>
    %79 = vector.shape_cast %76 : vector<2x32xf32> to vector<1x2x32xf32>
    tpu.vector_store %arg7[%c2, %c0_21, %c0_22], %79 {strides = array<i32>} : memref<8x2x32xf32, #tpu.memory_space<vmem>>, vector<1x2x32xf32>,
    %80 = vector.extract_strided_slice %7 {offsets = [3, 0, 0], sizes = [1, 2, 128], strides = [1, 1, 1]} : vector<8x2x128xf32> to vector<1x2x128xf32>
    %81 = vector.shape_cast %80 : vector<1x2x128xf32> to vector<2x128xf32>
    %cst_23 = arith.constant dense<0.000000e+00> : vector<2x128xf32>
    %82 = tpu.matmul %76, %8, %cst_23 {dimension_numbers = #tpu.dot_dimension_numbers<[1], [0], [0], [1], [0, 0, 1, 1], [], []>} : vector<2x32xf32>, vector<32x128xf32>, vector<2x128xf32> -> vector<2x128xf32>
    %83 = arith.addf %81, %82 : vector<2x128xf32>
    %84 = vector.extract_strided_slice %83 {offsets = [0, 0], sizes = [2, 96], strides = [1, 1]} : vector<2x128xf32> to vector<2x96xf32>
    %85 = arith.negf %84 : vector<2x96xf32>
    %86 = math.exp %85 : vector<2x96xf32>
    %cst_24 = arith.constant 1.000000e+00 : f32
    %87 = vector.broadcast %cst_24 : f32 to vector<2x96xf32>
    %88 = arith.addf %87, %86 : vector<2x96xf32>
    %89 = arith.divf %87, %88 : vector<2x96xf32>
    %90 = vector.extract_strided_slice %83 {offsets = [0, 96], sizes = [2, 32], strides = [1, 1]} : vector<2x128xf32> to vector<2x32xf32>
    %91 = math.tanh %90 : vector<2x32xf32>
    %92 = vector.extract_strided_slice %89 {offsets = [0, 0], sizes = [2, 32], strides = [1, 1]} : vector<2x96xf32> to vector<2x32xf32>
    %93 = vector.extract_strided_slice %89 {offsets = [0, 32], sizes = [2, 32], strides = [1, 1]} : vector<2x96xf32> to vector<2x32xf32>
    %94 = vector.extract_strided_slice %89 {offsets = [0, 64], sizes = [2, 32], strides = [1, 1]} : vector<2x96xf32> to vector<2x32xf32>
    %95 = arith.mulf %93, %74 : vector<2x32xf32>
    %96 = arith.mulf %92, %91 : vector<2x32xf32>
    %97 = arith.addf %95, %96 : vector<2x32xf32>
    %98 = math.tanh %97 : vector<2x32xf32>
    %99 = arith.mulf %94, %98 : vector<2x32xf32>
    %c3 = arith.constant 3 : index
    %c0_25 = arith.constant 0 : index
    %c0_26 = arith.constant 0 : index
    %100 = vector.load %arg7[%c3, %c0_25, %c0_26] : memref<8x2x32xf32, #tpu.memory_space<vmem>>, vector<1x2x32xf32>
    %101 = vector.shape_cast %100 : vector<1x2x32xf32> to vector<2x32xf32>
    %102 = vector.shape_cast %99 : vector<2x32xf32> to vector<1x2x32xf32>
    tpu.vector_store %arg7[%c3, %c0_25, %c0_26], %102 {strides = array<i32>} : memref<8x2x32xf32, #tpu.memory_space<vmem>>, vector<1x2x32xf32>,
    %103 = vector.extract_strided_slice %7 {offsets = [4, 0, 0], sizes = [1, 2, 128], strides = [1, 1, 1]} : vector<8x2x128xf32> to vector<1x2x128xf32>
    %104 = vector.shape_cast %103 : vector<1x2x128xf32> to vector<2x128xf32>
    %cst_27 = arith.constant dense<0.000000e+00> : vector<2x128xf32>
    %105 = tpu.matmul %99, %8, %cst_27 {dimension_numbers = #tpu.dot_dimension_numbers<[1], [0], [0], [1], [0, 0, 1, 1], [], []>} : vector<2x32xf32>, vector<32x128xf32>, vector<2x128xf32> -> vector<2x128xf32>
    %106 = arith.addf %104, %105 : vector<2x128xf32>
    %107 = vector.extract_strided_slice %106 {offsets = [0, 0], sizes = [2, 96], strides = [1, 1]} : vector<2x128xf32> to vector<2x96xf32>
    %108 = arith.negf %107 : vector<2x96xf32>
    %109 = math.exp %108 : vector<2x96xf32>
    %cst_28 = arith.constant 1.000000e+00 : f32
    %110 = vector.broadcast %cst_28 : f32 to vector<2x96xf32>
    %111 = arith.addf %110, %109 : vector<2x96xf32>
    %112 = arith.divf %110, %111 : vector<2x96xf32>
    %113 = vector.extract_strided_slice %106 {offsets = [0, 96], sizes = [2, 32], strides = [1, 1]} : vector<2x128xf32> to vector<2x32xf32>
    %114 = math.tanh %113 : vector<2x32xf32>
    %115 = vector.extract_strided_slice %112 {offsets = [0, 0], sizes = [2, 32], strides = [1, 1]} : vector<2x96xf32> to vector<2x32xf32>
    %116 = vector.extract_strided_slice %112 {offsets = [0, 32], sizes = [2, 32], strides = [1, 1]} : vector<2x96xf32> to vector<2x32xf32>
    %117 = vector.extract_strided_slice %112 {offsets = [0, 64], sizes = [2, 32], strides = [1, 1]} : vector<2x96xf32> to vector<2x32xf32>
    %118 = arith.mulf %116, %97 : vector<2x32xf32>
    %119 = arith.mulf %115, %114 : vector<2x32xf32>
    %120 = arith.addf %118, %119 : vector<2x32xf32>
    %121 = math.tanh %120 : vector<2x32xf32>
    %122 = arith.mulf %117, %121 : vector<2x32xf32>
    %c4 = arith.constant 4 : index
    %c0_29 = arith.constant 0 : index
    %c0_30 = arith.constant 0 : index
    %123 = vector.load %arg7[%c4, %c0_29, %c0_30] : memref<8x2x32xf32, #tpu.memory_space<vmem>>, vector<1x2x32xf32>
    %124 = vector.shape_cast %123 : vector<1x2x32xf32> to vector<2x32xf32>
    %125 = vector.shape_cast %122 : vector<2x32xf32> to vector<1x2x32xf32>
    tpu.vector_store %arg7[%c4, %c0_29, %c0_30], %125 {strides = array<i32>} : memref<8x2x32xf32, #tpu.memory_space<vmem>>, vector<1x2x32xf32>,
    %126 = vector.extract_strided_slice %7 {offsets = [5, 0, 0], sizes = [1, 2, 128], strides = [1, 1, 1]} : vector<8x2x128xf32> to vector<1x2x128xf32>
    %127 = vector.shape_cast %126 : vector<1x2x128xf32> to vector<2x128xf32>
    %cst_31 = arith.constant dense<0.000000e+00> : vector<2x128xf32>
    %128 = tpu.matmul %122, %8, %cst_31 {dimension_numbers = #tpu.dot_dimension_numbers<[1], [0], [0], [1], [0, 0, 1, 1], [], []>} : vector<2x32xf32>, vector<32x128xf32>, vector<2x128xf32> -> vector<2x128xf32>
    %129 = arith.addf %127, %128 : vector<2x128xf32>
    %130 = vector.extract_strided_slice %129 {offsets = [0, 0], sizes = [2, 96], strides = [1, 1]} : vector<2x128xf32> to vector<2x96xf32>
    %131 = arith.negf %130 : vector<2x96xf32>
    %132 = math.exp %131 : vector<2x96xf32>
    %cst_32 = arith.constant 1.000000e+00 : f32
    %133 = vector.broadcast %cst_32 : f32 to vector<2x96xf32>
    %134 = arith.addf %133, %132 : vector<2x96xf32>
    %135 = arith.divf %133, %134 : vector<2x96xf32>
    %136 = vector.extract_strided_slice %129 {offsets = [0, 96], sizes = [2, 32], strides = [1, 1]} : vector<2x128xf32> to vector<2x32xf32>
    %137 = math.tanh %136 : vector<2x32xf32>
    %138 = vector.extract_strided_slice %135 {offsets = [0, 0], sizes = [2, 32], strides = [1, 1]} : vector<2x96xf32> to vector<2x32xf32>
    %139 = vector.extract_strided_slice %135 {offsets = [0, 32], sizes = [2, 32], strides = [1, 1]} : vector<2x96xf32> to vector<2x32xf32>
    %140 = vector.extract_strided_slice %135 {offsets = [0, 64], sizes = [2, 32], strides = [1, 1]} : vector<2x96xf32> to vector<2x32xf32>
    %141 = arith.mulf %139, %120 : vector<2x32xf32>
    %142 = arith.mulf %138, %137 : vector<2x32xf32>
    %143 = arith.addf %141, %142 : vector<2x32xf32>
    %144 = math.tanh %143 : vector<2x32xf32>
    %145 = arith.mulf %140, %144 : vector<2x32xf32>
    %c5 = arith.constant 5 : index
    %c0_33 = arith.constant 0 : index
    %c0_34 = arith.constant 0 : index
    %146 = vector.load %arg7[%c5, %c0_33, %c0_34] : memref<8x2x32xf32, #tpu.memory_space<vmem>>, vector<1x2x32xf32>
    %147 = vector.shape_cast %146 : vector<1x2x32xf32> to vector<2x32xf32>
    %148 = vector.shape_cast %145 : vector<2x32xf32> to vector<1x2x32xf32>
    tpu.vector_store %arg7[%c5, %c0_33, %c0_34], %148 {strides = array<i32>} : memref<8x2x32xf32, #tpu.memory_space<vmem>>, vector<1x2x32xf32>,
    %149 = vector.extract_strided_slice %7 {offsets = [6, 0, 0], sizes = [1, 2, 128], strides = [1, 1, 1]} : vector<8x2x128xf32> to vector<1x2x128xf32>
    %150 = vector.shape_cast %149 : vector<1x2x128xf32> to vector<2x128xf32>
    %cst_35 = arith.constant dense<0.000000e+00> : vector<2x128xf32>
    %151 = tpu.matmul %145, %8, %cst_35 {dimension_numbers = #tpu.dot_dimension_numbers<[1], [0], [0], [1], [0, 0, 1, 1], [], []>} : vector<2x32xf32>, vector<32x128xf32>, vector<2x128xf32> -> vector<2x128xf32>
    %152 = arith.addf %150, %151 : vector<2x128xf32>
    %153 = vector.extract_strided_slice %152 {offsets = [0, 0], sizes = [2, 96], strides = [1, 1]} : vector<2x128xf32> to vector<2x96xf32>
    %154 = arith.negf %153 : vector<2x96xf32>
    %155 = math.exp %154 : vector<2x96xf32>
    %cst_36 = arith.constant 1.000000e+00 : f32
    %156 = vector.broadcast %cst_36 : f32 to vector<2x96xf32>
    %157 = arith.addf %156, %155 : vector<2x96xf32>
    %158 = arith.divf %156, %157 : vector<2x96xf32>
    %159 = vector.extract_strided_slice %152 {offsets = [0, 96], sizes = [2, 32], strides = [1, 1]} : vector<2x128xf32> to vector<2x32xf32>
    %160 = math.tanh %159 : vector<2x32xf32>
    %161 = vector.extract_strided_slice %158 {offsets = [0, 0], sizes = [2, 32], strides = [1, 1]} : vector<2x96xf32> to vector<2x32xf32>
    %162 = vector.extract_strided_slice %158 {offsets = [0, 32], sizes = [2, 32], strides = [1, 1]} : vector<2x96xf32> to vector<2x32xf32>
    %163 = vector.extract_strided_slice %158 {offsets = [0, 64], sizes = [2, 32], strides = [1, 1]} : vector<2x96xf32> to vector<2x32xf32>
    %164 = arith.mulf %162, %143 : vector<2x32xf32>
    %165 = arith.mulf %161, %160 : vector<2x32xf32>
    %166 = arith.addf %164, %165 : vector<2x32xf32>
    %167 = math.tanh %166 : vector<2x32xf32>
    %168 = arith.mulf %163, %167 : vector<2x32xf32>
    %c6 = arith.constant 6 : index
    %c0_37 = arith.constant 0 : index
    %c0_38 = arith.constant 0 : index
    %169 = vector.load %arg7[%c6, %c0_37, %c0_38] : memref<8x2x32xf32, #tpu.memory_space<vmem>>, vector<1x2x32xf32>
    %170 = vector.shape_cast %169 : vector<1x2x32xf32> to vector<2x32xf32>
    %171 = vector.shape_cast %168 : vector<2x32xf32> to vector<1x2x32xf32>
    tpu.vector_store %arg7[%c6, %c0_37, %c0_38], %171 {strides = array<i32>} : memref<8x2x32xf32, #tpu.memory_space<vmem>>, vector<1x2x32xf32>,
    %172 = vector.extract_strided_slice %7 {offsets = [7, 0, 0], sizes = [1, 2, 128], strides = [1, 1, 1]} : vector<8x2x128xf32> to vector<1x2x128xf32>
    %173 = vector.shape_cast %172 : vector<1x2x128xf32> to vector<2x128xf32>
    %cst_39 = arith.constant dense<0.000000e+00> : vector<2x128xf32>
    %174 = tpu.matmul %168, %8, %cst_39 {dimension_numbers = #tpu.dot_dimension_numbers<[1], [0], [0], [1], [0, 0, 1, 1], [], []>} : vector<2x32xf32>, vector<32x128xf32>, vector<2x128xf32> -> vector<2x128xf32>
    %175 = arith.addf %173, %174 : vector<2x128xf32>
    %176 = vector.extract_strided_slice %175 {offsets = [0, 0], sizes = [2, 96], strides = [1, 1]} : vector<2x128xf32> to vector<2x96xf32>
    %177 = arith.negf %176 : vector<2x96xf32>
    %178 = math.exp %177 : vector<2x96xf32>
    %cst_40 = arith.constant 1.000000e+00 : f32
    %179 = vector.broadcast %cst_40 : f32 to vector<2x96xf32>
    %180 = arith.addf %179, %178 : vector<2x96xf32>
    %181 = arith.divf %179, %180 : vector<2x96xf32>
    %182 = vector.extract_strided_slice %175 {offsets = [0, 96], sizes = [2, 32], strides = [1, 1]} : vector<2x128xf32> to vector<2x32xf32>
    %183 = math.tanh %182 : vector<2x32xf32>
    %184 = vector.extract_strided_slice %181 {offsets = [0, 0], sizes = [2, 32], strides = [1, 1]} : vector<2x96xf32> to vector<2x32xf32>
    %185 = vector.extract_strided_slice %181 {offsets = [0, 32], sizes = [2, 32], strides = [1, 1]} : vector<2x96xf32> to vector<2x32xf32>
    %186 = vector.extract_strided_slice %181 {offsets = [0, 64], sizes = [2, 32], strides = [1, 1]} : vector<2x96xf32> to vector<2x32xf32>
    %187 = arith.mulf %185, %166 : vector<2x32xf32>
    %188 = arith.mulf %184, %183 : vector<2x32xf32>
    %189 = arith.addf %187, %188 : vector<2x32xf32>
    %190 = math.tanh %189 : vector<2x32xf32>
    %191 = arith.mulf %186, %190 : vector<2x32xf32>
    %c7 = arith.constant 7 : index
    %c0_41 = arith.constant 0 : index
    %c0_42 = arith.constant 0 : index
    %192 = vector.load %arg7[%c7, %c0_41, %c0_42] : memref<8x2x32xf32, #tpu.memory_space<vmem>>, vector<1x2x32xf32>
    %193 = vector.shape_cast %192 : vector<1x2x32xf32> to vector<2x32xf32>
    %194 = vector.shape_cast %191 : vector<2x32xf32> to vector<1x2x32xf32>
    tpu.vector_store %arg7[%c7, %c0_41, %c0_42], %194 {strides = array<i32>} : memref<8x2x32xf32, #tpu.memory_space<vmem>>, vector<1x2x32xf32>,
    %c0_43 = arith.constant 0 : index
    %c0_44 = arith.constant 0 : index
    %c0_45 = arith.constant 0 : index
    %195 = vector.load %arg7[%c0_43, %c0_44, %c0_45] : memref<8x2x32xf32, #tpu.memory_space<vmem>>, vector<8x2x32xf32>
    %196 = vector.shape_cast %195 : vector<8x2x32xf32> to vector<16x32xf32>
    %c0_46 = arith.constant 0 : index
    %c0_47 = arith.constant 0 : index
    %197 = vector.load %arg4[%c0_46, %c0_47] : memref<32x1xf32, #tpu.memory_space<vmem>>, vector<32x1xf32>
    %cst_48 = arith.constant dense<0.000000e+00> : vector<16x1xf32>
    %198 = tpu.matmul %196, %197, %cst_48 {dimension_numbers = #tpu.dot_dimension_numbers<[1], [0], [0], [1], [0, 0, 1, 1], [], []>} : vector<16x32xf32>, vector<32x1xf32>, vector<16x1xf32> -> vector<16x1xf32>
    %c0_49 = arith.constant 0 : index
    %c0_50 = arith.constant 0 : index
    %199 = vector.load %arg5[%c0_49, %c0_50] : memref<1x1xf32, #tpu.memory_space<vmem>>, vector<1x1xf32>
    %200 = vector.broadcast %199 : vector<1x1xf32> to vector<16x1xf32>
    %201 = arith.addf %198, %200 : vector<16x1xf32>
    %202 = vector.shape_cast %201 : vector<16x1xf32> to vector<8x2x1xf32>
    %c0_51 = arith.constant 0 : index
    %c0_52 = arith.constant 0 : index
    %c0_53 = arith.constant 0 : index
    %203 = vector.load %arg6[%c0_51, %c0_52, %c0_53] : memref<8x2x1xf32, #tpu.memory_space<vmem>>, vector<8x2x1xf32>
    tpu.vector_store %arg6[%c0_51, %c0_52, %c0_53], %202 {strides = array<i32>} : memref<8x2x1xf32, #tpu.memory_space<vmem>>, vector<8x2x1xf32>,
    return
  }
}

</mosaic_0001>

<llo_original>
// kernel: tpu_custom_call.1
$region0: #{tpu_custom_call.1}
  #allocation0 [shape = 'u32[]', space=smem, size = 0x4, offset = 0x4, fixed_abs, tag = 'smem constant byte address 0x4 - core index']
  #allocation1 [shape = 'u32[144,128]{1,0:T(1,128)}', space=vmem, size = 0x12000, scoped, tag = 'internal scratch']
  #allocation2 [shape = 'f32[8,2,32]{2,1,0:T(2,128)}', space=vmem, size = 0x2000, scoped, tag = 'scratch operand']
  #allocation3 [shape = 'f32[1,1]{1,0:T(1,128)S(1)}', space=vmem, size = 0x200, scoped, tag = 'scoped memory for tpu_custom_call.1']
  %s0 = inlined_call_operand.hbm [shape: f32[8,2,16], index: 0, kind: input, shape index: {}]
  %s1 = inlined_call_operand.hbm [shape: f32[16,128], index: 1, kind: input, shape index: {}]
  %s2 = inlined_call_operand.vmem [shape: f32[32,128], index: 2, kind: input, shape index: {}]
  %s3 = inlined_call_operand.vmem [shape: f32[1,128], index: 3, kind: input, shape index: {}]
  %s4 = inlined_call_operand.vmem [shape: f32[32,1], index: 4, kind: input, shape index: {}]
  %s5 = inlined_call_operand.<no memory space> [shape: f32[1,1], index: 5, kind: input, shape index: {}]
  %s6 = inlined_call_operand.vmem [shape: f32[8,2,1], index: 6, kind: output, shape index: {}]
  %s7 = sld [smem:[#allocation0]]
  $region42: #{tpu_custom_call.1} parent=0
    _
  %s9 = ssub.s32 1, %s7
  %s10 = scalar_select 0, %s9, %s7
  %v11 = vstv %s5
  %12 = vst [vmem:[#allocation3] sm:$0x1] %v11
  $region1: #{tpu_custom_call.1} parent=0
    #allocation4 [shape = 'u8[8192]{0}', space=vmem, size = 0x2000, scoped, tag = 'input window, operand 0, single buffered']
    #allocation5 [shape = 's32[1]{0}', space=sflag, size = 0x4, scoped, tag = 'scoped memory for tpu_custom_call.1']
    #allocation6 [shape = 'u8[8192]{0}', space=vmem, size = 0x2000, scoped, tag = 'input window, operand 1, single buffered']
    #allocation7 [shape = 's32[1]{0}', space=sflag, size = 0x4, scoped, tag = 'scoped memory for tpu_custom_call.1']
    %13 = vsyncpa [#allocation5], 0
    %14 = vsyncpa [#allocation7], 0
    // Predicated region
    $region2: #{tpu_custom_call.1} parent=1 // pred_check
      _
    $region3: #{tpu_custom_call.1} parent=1 // pred_check_branch
      %16 = sbr.rel (0) target = $region5
    $region4: #{tpu_custom_call.1} parent=1 // pred_region
      %s18 = ssub.s32 256, 256
      %19 = vsyncadd [#allocation5], %s18
      %s20 = sshll.u32 [#allocation4], 4
      %s21 = int_to_ptr.vmem [resolvable:$true] %s20
      %26 = dma.hbm_to_vmem [thread:$0]  %s0, 256, %s21, [#allocation5], 32, 32, 2
    $region5: #{tpu_custom_call.1} parent=1 // pred_fallthru
      _
    // Predicated region
    $region6: #{tpu_custom_call.1} parent=1 // pred_check
      _
    $region7: #{tpu_custom_call.1} parent=1 // pred_check_branch
      %28 = sbr.rel (0) target = $region9
    $region8: #{tpu_custom_call.1} parent=1 // pred_region
      %s30 = ssub.s32 256, 256
      %31 = vsyncadd [#allocation7], %s30
      %s32 = sshll.u32 [#allocation6], 4
      %s33 = int_to_ptr.vmem [resolvable:$true] %s32
      %38 = dma.hbm_to_vmem [thread:$0]  %s1, 256, %s33, [#allocation7], 128, 128, 8
    $region9: #{tpu_custom_call.1} parent=1 // pred_fallthru
      _
    // Predicated region
    $region10: #{tpu_custom_call.1} parent=1 // pred_check
      _
    $region11: #{tpu_custom_call.1} parent=1 // pred_check_branch
      %40 = sbr.rel (0) target = $region13
    $region12: #{tpu_custom_call.1} parent=1 // pred_region
      _
    $region13: #{tpu_custom_call.1} parent=1 // pred_fallthru
      _
    // Predicated region
    $region14: #{tpu_custom_call.1} parent=1 // pred_check
      _
    $region15: #{tpu_custom_call.1} parent=1 // pred_check_branch
      %42 = sbr.rel (0) target = $region17
    $region16: #{tpu_custom_call.1} parent=1 // pred_region
      _
    $region17: #{tpu_custom_call.1} parent=1 // pred_fallthru
      _
    // Predicated region
    $region18: #{tpu_custom_call.1} parent=1 // pred_check
      _
    $region19: #{tpu_custom_call.1} parent=1 // pred_check_branch
      %44 = sbr.rel (0) target = $region21
    $region20: #{tpu_custom_call.1} parent=1 // pred_region
      _
    $region21: #{tpu_custom_call.1} parent=1 // pred_fallthru
      _
    // Predicated region
    $region22: #{tpu_custom_call.1} parent=1 // pred_check
      _
    $region23: #{tpu_custom_call.1} parent=1 // pred_check_branch
      %46 = sbr.rel (0) target = $region25
    $region24: #{tpu_custom_call.1} parent=1 // pred_region
      _
    $region25: #{tpu_custom_call.1} parent=1 // pred_fallthru
      _
    // Predicated region
    $region26: #{tpu_custom_call.1} parent=1 // pred_check
      _
    $region27: #{tpu_custom_call.1} parent=1 // pred_check_branch
      %48 = sbr.rel (0) target = $region29
    $region28: #{tpu_custom_call.1} parent=1 // pred_region
      %49 = dma.done [#allocation5], 256
    $region29: #{tpu_custom_call.1} parent=1 // pred_fallthru
      _
    // Predicated region
    $region30: #{tpu_custom_call.1} parent=1 // pred_check
      _
    $region31: #{tpu_custom_call.1} parent=1 // pred_check_branch
      %51 = sbr.rel (0) target = $region33
    $region32: #{tpu_custom_call.1} parent=1 // pred_region
      %52 = dma.done [#allocation7], 256
    $region33: #{tpu_custom_call.1} parent=1 // pred_fallthru
      _
    %v53 = vld [vmem:[#allocation4] sm:$0x3]
    %v54 = vld [vmem:[#allocation4 + $0x2] sm:$0x3]
    %v55 = vld [vmem:[#allocation4 + $0x4] sm:$0x3]
    %v56 = vld [vmem:[#allocation4 + $0x6] sm:$0x3]
    %v57 = vld [vmem:[#allocation4 + $0x8] sm:$0x3]
    %v58 = vld [vmem:[#allocation4 + $0xa] sm:$0x3]
    %v59 = vld [vmem:[#allocation4 + $0xc] sm:$0x3]
    %v60 = vld [vmem:[#allocation4 + $0xe] sm:$0x3]
    %v61 = vld [vmem:[#allocation6] sm:$0xff]
    %v62 = vld [vmem:[#allocation6 + $0x8] sm:$0xff]
    %v63 = vld [vmem:[%s3] sm:$0x1]
    %v65 = vlaneseq
    %v66 = vshrl.u32 %v65, 7
    %v67 = vsub.s32 0, %v66
    %v68 = vrot.slane %v63, %v67
    %v78 = vcombine.low %v53, %v54
    %v79 = vcombine.low %v55, %v56
    %v81 = vunpack.c.l.s4 1983009808
    %v82 = vunpack.c.0.s8 %v81
    %v83 = vlaneseq
    %v84 = vshrl.u32 %v83, 7
    %v85 = vsub.s32 %v82, %v84
    %v86 = vrot.slane %v78, %v85
    %v88 = vunpack.c.l.s4 1983009808
    %v89 = vunpack.c.0.s8 %v88
    %v90 = vlaneseq
    %v91 = vshrl.u32 %v90, 7
    %v92 = vsub.s32 %v89, %v91
    %v93 = vrot.slane %v79, %v92
    %v94 = vcombine.low %v86, %v93
    %v95 = vcombine.low %v57, %v58
    %v96 = vcombine.low %v59, %v60
    %v98 = vunpack.c.l.s4 1983009808
    %v99 = vunpack.c.0.s8 %v98
    %v100 = vlaneseq
    %v101 = vshrl.u32 %v100, 7
    %v102 = vsub.s32 %v99, %v101
    %v103 = vrot.slane %v95, %v102
    %v105 = vunpack.c.l.s4 1983009808
    %v106 = vunpack.c.0.s8 %v105
    %v107 = vlaneseq
    %v108 = vshrl.u32 %v107, 7
    %v109 = vsub.s32 %v106, %v108
    %v110 = vrot.slane %v96, %v109
    %v111 = vcombine.low %v103, %v110
    %vm112 = vcmask 130048
    %v113 = vsel %vm112, %v94, 0
    %v115 = vsel %vm112, %v111, 0
    %117 = vmatprep.subr.mxu0 0.0
    %118 = vmatpush1.msra.mxu0 %v61
    %119 = vmatprep.subr.mxu0 0.0
    %120 = vmatpush1.msra.mxu0 %v62
    %121 = vmatprep.subr.mxu0 0.0
    %122 = vmatpush1.msra.mxu0 0.0
    %123 = vmatprep.subr.mxu0 0.0
    %124 = vmatpush1.msra.mxu0 0.0
    %125 = vmatprep.subr.mxu0 0.0
    %126 = vmatpush1.msra.mxu0 0.0
    %127 = vmatprep.subr.mxu0 0.0
    %128 = vmatpush1.msra.mxu0 0.0
    %129 = vmatprep.subr.mxu0 0.0
    %130 = vmatpush1.msra.mxu0 0.0
    %131 = vmatprep.subr.mxu0 0.0
    %132 = vmatpush1.msra.mxu0 0.0
    %133 = vmatprep.subr.mxu0 0.0
    %134 = vmatpush1.msra.mxu0 0.0
    %135 = vmatprep.subr.mxu0 0.0
    %136 = vmatpush1.msra.mxu0 0.0
    %137 = vmatprep.subr.mxu0 0.0
    %138 = vmatpush1.msra.mxu0 0.0
    %139 = vmatprep.subr.mxu0 0.0
    %140 = vmatpush1.msra.mxu0 0.0
    %141 = vmatprep.subr.mxu0 0.0
    %142 = vmatpush1.msra.mxu0 0.0
    %143 = vmatprep.subr.mxu0 0.0
    %144 = vmatpush1.msra.mxu0 0.0
    %145 = vmatprep.subr.mxu0 0.0
    %146 = vmatpush1.msra.mxu0 0.0
    %147 = vmatprep.subr.mxu0 0.0
    %148 = vmatpush1.msra.mxu0 0.0
    %149 = vmatprep.subr.mxu0 0.0
    %150 = vmatpush1.msra.mxu0 0.0
    %151 = vmatprep.subr.mxu0 0.0
    %152 = vmatpush1.msra.mxu0 0.0
    %153 = vmatprep.subr.mxu0 0.0
    %154 = vmatpush1.msra.mxu0 0.0
    %155 = vmatprep.subr.mxu0 0.0
    %156 = vmatpush1.msra.mxu0 0.0
    %157 = vmatprep.subr.mxu0 0.0
    %158 = vmatpush1.msra.mxu0 0.0
    %159 = vmatprep.subr.mxu0 0.0
    %160 = vmatpush1.msra.mxu0 0.0
    %161 = vmatprep.subr.mxu0 0.0
    %162 = vmatpush1.msra.mxu0 0.0
    %163 = vmatprep.subr.mxu0 0.0
    %164 = vmatpush1.msra.mxu0 0.0
    %165 = vmatprep.subr.mxu0 0.0
    %166 = vmatpush1.msra.mxu0 0.0
    %167 = vmatprep.subr.mxu0 0.0
    %168 = vmatpush1.msra.mxu0 0.0
    %169 = vmatprep.subr.mxu0 0.0
    %170 = vmatpush1.msra.mxu0 0.0
    %171 = vmatprep.subr.mxu0 0.0
    %172 = vmatpush1.msra.mxu0 0.0
    %173 = vmatprep.subr.mxu0 0.0
    %174 = vmatpush1.msra.mxu0 0.0
    %175 = vmatprep.subr.mxu0 0.0
    %176 = vmatpush1.msra.mxu0 0.0
    %177 = vmatprep.subr.mxu0 0.0
    %178 = vmatpush1.msra.mxu0 0.0
    %179 = vmatprep.subr.mxu0 0.0
    %180 = vmatpush1.msra.mxu0 0.0
    %181 = vmatprep.mubr.f32.mxu0 0.0
    %182 = vmatmul.mubr.f32.gmra.mrb[0].mxu0 %v113
    %v183 = vpop.f32.mrb[0].mxu0
    %v184 = vadd.f32 %v68, %v183
    %v185 = vpop.f32.mrb[0].mxu0
    %186 = vmatprep.mubr.f32.mxu0 0.0
    %187 = vmatmul.mubr.f32.gmra.mrb[0].mxu0 %v115
    %v188 = vpop.f32.mrb[0].mxu0
    %v189 = vadd.f32 %v68, %v188
    %v190 = vpop.f32.mrb[0].mxu0
    %191 = vdwg.mxu0
    %v194 = vcombine.high %v184, %v184
    %v196 = vunpack.c.l.s4 1983009808
    %v197 = vunpack.c.0.s8 %v196
    %v198 = vlaneseq
    %v199 = vshrl.u32 %v198, 7
    %v200 = vsub.s32 %v197, %v199
    %v201 = vrot.slane %v184, %v200
    %v203 = vunpack.c.l.s4 1983009808
    %v204 = vunpack.c.0.s8 %v203
    %v205 = vlaneseq
    %v206 = vshrl.u32 %v205, 7
    %v207 = vsub.s32 %v204, %v206
    %v208 = vrot.slane %v194, %v207
    %v209 = vcombine.high %v201, %v201
    %v210 = vcombine.high %v208, %v208
    %v211 = vcombine.high %v189, %v189
    %v213 = vunpack.c.l.s4 1983009808
    %v214 = vunpack.c.0.s8 %v213
    %v215 = vlaneseq
    %v216 = vshrl.u32 %v215, 7
    %v217 = vsub.s32 %v214, %v216
    %v218 = vrot.slane %v189, %v217
    %v220 = vunpack.c.l.s4 1983009808
    %v221 = vunpack.c.0.s8 %v220
    %v222 = vlaneseq
    %v223 = vshrl.u32 %v222, 7
    %v224 = vsub.s32 %v221, %v223
    %v225 = vrot.slane %v211, %v224
    %v226 = vcombine.high %v218, %v218
    %v227 = vcombine.high %v225, %v225
    %v236 = vld [vmem:[%s2] sm:$0xff]
    %v237 = vld [vmem:[%s2 + $0x8] sm:$0xff]
    %v238 = vld [vmem:[%s2 + $0x10] sm:$0xff]
    %v239 = vld [vmem:[%s2 + $0x18] sm:$0xff]
    %vm240 = vcmask 261120
    %v242 = vsel %vm240, 0.0, 0
    %244 = vmatprep.subr.mxu0 0.0
    %245 = vmatpush1.msra.mxu0 %v236
    %246 = vmatprep.subr.mxu0 0.0
    %247 = vmatpush1.msra.mxu0 %v237
    %248 = vmatprep.subr.mxu0 0.0
    %249 = vmatpush1.msra.mxu0 %v238
    %250 = vmatprep.subr.mxu0 0.0
    %251 = vmatpush1.msra.mxu0 %v239
    %252 = vmatprep.subr.mxu0 0.0
    %253 = vmatpush1.msra.mxu0 0.0
    %254 = vmatprep.subr.mxu0 0.0
    %255 = vmatpush1.msra.mxu0 0.0
    %256 = vmatprep.subr.mxu0 0.0
    %257 = vmatpush1.msra.mxu0 0.0
    %258 = vmatprep.subr.mxu0 0.0
    %259 = vmatpush1.msra.mxu0 0.0
    %260 = vmatprep.subr.mxu0 0.0
    %261 = vmatpush1.msra.mxu0 0.0
    %262 = vmatprep.subr.mxu0 0.0
    %263 = vmatpush1.msra.mxu0 0.0
    %264 = vmatprep.subr.mxu0 0.0
    %265 = vmatpush1.msra.mxu0 0.0
    %266 = vmatprep.subr.mxu0 0.0
    %267 = vmatpush1.msra.mxu0 0.0
    %268 = vmatprep.subr.mxu0 0.0
    %269 = vmatpush1.msra.mxu0 0.0
    %270 = vmatprep.subr.mxu0 0.0
    %271 = vmatpush1.msra.mxu0 0.0
    %272 = vmatprep.subr.mxu0 0.0
    %273 = vmatpush1.msra.mxu0 0.0
    %274 = vmatprep.subr.mxu0 0.0
    %275 = vmatpush1.msra.mxu0 0.0
    %276 = vmatprep.subr.mxu0 0.0
    %277 = vmatpush1.msra.mxu0 0.0
    %278 = vmatprep.subr.mxu0 0.0
    %279 = vmatpush1.msra.mxu0 0.0
    %280 = vmatprep.subr.mxu0 0.0
    %281 = vmatpush1.msra.mxu0 0.0
    %282 = vmatprep.subr.mxu0 0.0
    %283 = vmatpush1.msra.mxu0 0.0
    %284 = vmatprep.subr.mxu0 0.0
    %285 = vmatpush1.msra.mxu0 0.0
    %286 = vmatprep.subr.mxu0 0.0
    %287 = vmatpush1.msra.mxu0 0.0
    %288 = vmatprep.subr.mxu0 0.0
    %289 = vmatpush1.msra.mxu0 0.0
    %290 = vmatprep.subr.mxu0 0.0
    %291 = vmatpush1.msra.mxu0 0.0
    %292 = vmatprep.subr.mxu0 0.0
    %293 = vmatpush1.msra.mxu0 0.0
    %294 = vmatprep.subr.mxu0 0.0
    %295 = vmatpush1.msra.mxu0 0.0
    %296 = vmatprep.subr.mxu0 0.0
    %297 = vmatpush1.msra.mxu0 0.0
    %298 = vmatprep.subr.mxu0 0.0
    %299 = vmatpush1.msra.mxu0 0.0
    %300 = vmatprep.subr.mxu0 0.0
    %301 = vmatpush1.msra.mxu0 0.0
    %302 = vmatprep.subr.mxu0 0.0
    %303 = vmatpush1.msra.mxu0 0.0
    %304 = vmatprep.subr.mxu0 0.0
    %305 = vmatpush1.msra.mxu0 0.0
    %306 = vmatprep.subr.mxu0 0.0
    %307 = vmatpush1.msra.mxu0 0.0
    %308 = vmatprep.mubr.f32.mxu0 0.0
    %309 = vmatmul.mubr.f32.gmra.mrb[0].mxu0 %v242
    %v310 = vpop.f32.mrb[0].mxu0
    %v311 = vadd.f32 0.0, %v310
    %v312 = vpop.f32.mrb[0].mxu0
    %313 = vdwg.mxu0
    %v314 = vadd.f32 %v201, %v311
    %v315 = vxor.u32 %v314, 2147483648
    %v316 = vmul.f32 %v315, 1.442695
    %v317 = vpow.pop %v316
    %v318 = vadd.f32 %v317, 1.0
    %v319 = vrcp.pop %v318
    %v320 = vmul.f32 1.0, %v319
    %v321 = vtanh.pop %v314
    %v322 = vmul.f32 %v320, 0.0
    %324 = vrot.lane.b32.xlu0 %v321, 32
    %v325 = vpop.permute.xlu0 %324
    %v327 = vmul.f32 %v320, %v325
    %329 = vrot.lane.b32.xlu0 %v327, 32
    %v330 = vpop.permute.xlu0 %329
    %v332 = vadd.f32 %v322, %v330
    %v333 = vtanh.pop %v332
    %335 = vrot.lane.b32.xlu0 %v333, 32
    %v336 = vpop.permute.xlu0 %335
    %v338 = vmul.f32 %v320, %v336
    %v341 = vunpack.c.l.s4 1983009808
    %v342 = vunpack.c.0.s8 %v341
    %v343 = vlaneseq
    %v344 = vshrl.u32 %v343, 7
    %v345 = vsub.s32 %v342, %v344
    %v346 = vrot.slane %v338, %v345
    %347 = vrot.lane.b32.xlu0 %v346, 64
    %v348 = vpop.permute.xlu0 %347
    %vm350 = vcmask 254976
    %351 = vst.msk [vmem:[#allocation2] sm:$0x3] %vm350, %v348
    %v352 = vsel %vm240, %v348, 0
    %354 = vmatprep.subr.mxu0 0.0
    %355 = vmatpush1.msra.mxu0 %v236
    %356 = vmatprep.subr.mxu0 0.0
    %357 = vmatpush1.msra.mxu0 %v237
    %358 = vmatprep.subr.mxu0 0.0
    %359 = vmatpush1.msra.mxu0 %v238
    %360 = vmatprep.subr.mxu0 0.0
    %361 = vmatpush1.msra.mxu0 %v239
    %362 = vmatprep.subr.mxu0 0.0
    %363 = vmatpush1.msra.mxu0 0.0
    %364 = vmatprep.subr.mxu0 0.0
    %365 = vmatpush1.msra.mxu0 0.0
    %366 = vmatprep.subr.mxu0 0.0
    %367 = vmatpush1.msra.mxu0 0.0
    %368 = vmatprep.subr.mxu0 0.0
    %369 = vmatpush1.msra.mxu0 0.0
    %370 = vmatprep.subr.mxu0 0.0
    %371 = vmatpush1.msra.mxu0 0.0
    %372 = vmatprep.subr.mxu0 0.0
    %373 = vmatpush1.msra.mxu0 0.0
    %374 = vmatprep.subr.mxu0 0.0
    %375 = vmatpush1.msra.mxu0 0.0
    %376 = vmatprep.subr.mxu0 0.0
    %377 = vmatpush1.msra.mxu0 0.0
    %378 = vmatprep.subr.mxu0 0.0
    %379 = vmatpush1.msra.mxu0 0.0
    %380 = vmatprep.subr.mxu0 0.0
    %381 = vmatpush1.msra.mxu0 0.0
    %382 = vmatprep.subr.mxu0 0.0
    %383 = vmatpush1.msra.mxu0 0.0
    %384 = vmatprep.subr.mxu0 0.0
    %385 = vmatpush1.msra.mxu0 0.0
    %386 = vmatprep.subr.mxu0 0.0
    %387 = vmatpush1.msra.mxu0 0.0
    %388 = vmatprep.subr.mxu0 0.0
    %389 = vmatpush1.msra.mxu0 0.0
    %390 = vmatprep.subr.mxu0 0.0
    %391 = vmatpush1.msra.mxu0 0.0
    %392 = vmatprep.subr.mxu0 0.0
    %393 = vmatpush1.msra.mxu0 0.0
    %394 = vmatprep.subr.mxu0 0.0
    %395 = vmatpush1.msra.mxu0 0.0
    %396 = vmatprep.subr.mxu0 0.0
    %397 = vmatpush1.msra.mxu0 0.0
    %398 = vmatprep.subr.mxu0 0.0
    %399 = vmatpush1.msra.mxu0 0.0
    %400 = vmatprep.subr.mxu0 0.0
    %401 = vmatpush1.msra.mxu0 0.0
    %402 = vmatprep.subr.mxu0 0.0
    %403 = vmatpush1.msra.mxu0 0.0
    %404 = vmatprep.subr.mxu0 0.0
    %405 = vmatpush1.msra.mxu0 0.0
    %406 = vmatprep.subr.mxu0 0.0
    %407 = vmatpush1.msra.mxu0 0.0
    %408 = vmatprep.subr.mxu0 0.0
    %409 = vmatpush1.msra.mxu0 0.0
    %410 = vmatprep.subr.mxu0 0.0
    %411 = vmatpush1.msra.mxu0 0.0
    %412 = vmatprep.subr.mxu0 0.0
    %413 = vmatpush1.msra.mxu0 0.0
    %414 = vmatprep.subr.mxu0 0.0
    %415 = vmatpush1.msra.mxu0 0.0
    %416 = vmatprep.subr.mxu0 0.0
    %417 = vmatpush1.msra.mxu0 0.0
    %418 = vmatprep.mubr.f32.mxu0 0.0
    %419 = vmatmul.mubr.f32.gmra.mrb[0].mxu0 %v352
    %v420 = vpop.f32.mrb[0].mxu0
    %v421 = vadd.f32 0.0, %v420
    %v422 = vpop.f32.mrb[0].mxu0
    %423 = vdwg.mxu0
    %v424 = vadd.f32 %v209, %v421
    %v425 = vxor.u32 %v424, 2147483648
    %v426 = vmul.f32 %v425, 1.442695
    %v427 = vpow.pop %v426
    %v428 = vadd.f32 %v427, 1.0
    %v429 = vrcp.pop %v428
    %v430 = vmul.f32 1.0, %v429
    %v431 = vtanh.pop %v424
    %v432 = vmul.f32 %v430, %v332
    %434 = vrot.lane.b32.xlu0 %v431, 32
    %v435 = vpop.permute.xlu0 %434
    %v437 = vmul.f32 %v430, %v435
    %439 = vrot.lane.b32.xlu0 %v437, 32
    %v440 = vpop.permute.xlu0 %439
    %v442 = vadd.f32 %v432, %v440
    %v443 = vtanh.pop %v442
    %445 = vrot.lane.b32.xlu0 %v443, 32
    %v446 = vpop.permute.xlu0 %445
    %v448 = vmul.f32 %v430, %v446
    %v451 = vunpack.c.l.s4 1983009808
    %v452 = vunpack.c.0.s8 %v451
    %v453 = vlaneseq
    %v454 = vshrl.u32 %v453, 7
    %v455 = vsub.s32 %v452, %v454
    %v456 = vrot.slane %v448, %v455
    %457 = vrot.lane.b32.xlu0 %v456, 64
    %v458 = vpop.permute.xlu0 %457
    %s460 = scalar_lea.vmem [#allocation2], 2
    %461 = vst.msk [vmem:[%s460] sm:$0x3] %vm350, %v458
    %v462 = vsel %vm240, %v458, 0
    %464 = vmatprep.subr.mxu0 0.0
    %465 = vmatpush1.msra.mxu0 %v236
    %466 = vmatprep.subr.mxu0 0.0
    %467 = vmatpush1.msra.mxu0 %v237
    %468 = vmatprep.subr.mxu0 0.0
    %469 = vmatpush1.msra.mxu0 %v238
    %470 = vmatprep.subr.mxu0 0.0
    %471 = vmatpush1.msra.mxu0 %v239
    %472 = vmatprep.subr.mxu0 0.0
    %473 = vmatpush1.msra.mxu0 0.0
    %474 = vmatprep.subr.mxu0 0.0
    %475 = vmatpush1.msra.mxu0 0.0
    %476 = vmatprep.subr.mxu0 0.0
    %477 = vmatpush1.msra.mxu0 0.0
    %478 = vmatprep.subr.mxu0 0.0
    %479 = vmatpush1.msra.mxu0 0.0
    %480 = vmatprep.subr.mxu0 0.0
    %481 = vmatpush1.msra.mxu0 0.0
    %482 = vmatprep.subr.mxu0 0.0
    %483 = vmatpush1.msra.mxu0 0.0
    %484 = vmatprep.subr.mxu0 0.0
    %485 = vmatpush1.msra.mxu0 0.0
    %486 = vmatprep.subr.mxu0 0.0
    %487 = vmatpush1.msra.mxu0 0.0
    %488 = vmatprep.subr.mxu0 0.0
    %489 = vmatpush1.msra.mxu0 0.0
    %490 = vmatprep.subr.mxu0 0.0
    %491 = vmatpush1.msra.mxu0 0.0
    %492 = vmatprep.subr.mxu0 0.0
    %493 = vmatpush1.msra.mxu0 0.0
    %494 = vmatprep.subr.mxu0 0.0
    %495 = vmatpush1.msra.mxu0 0.0
    %496 = vmatprep.subr.mxu0 0.0
    %497 = vmatpush1.msra.mxu0 0.0
    %498 = vmatprep.subr.mxu0 0.0
    %499 = vmatpush1.msra.mxu0 0.0
    %500 = vmatprep.subr.mxu0 0.0
    %501 = vmatpush1.msra.mxu0 0.0
    %502 = vmatprep.subr.mxu0 0.0
    %503 = vmatpush1.msra.mxu0 0.0
    %504 = vmatprep.subr.mxu0 0.0
    %505 = vmatpush1.msra.mxu0 0.0
    %506 = vmatprep.subr.mxu0 0.0
    %507 = vmatpush1.msra.mxu0 0.0
    %508 = vmatprep.subr.mxu0 0.0
    %509 = vmatpush1.msra.mxu0 0.0
    %510 = vmatprep.subr.mxu0 0.0
    %511 = vmatpush1.msra.mxu0 0.0
    %512 = vmatprep.subr.mxu0 0.0
    %513 = vmatpush1.msra.mxu0 0.0
    %514 = vmatprep.subr.mxu0 0.0
    %515 = vmatpush1.msra.mxu0 0.0
    %516 = vmatprep.subr.mxu0 0.0
    %517 = vmatpush1.msra.mxu0 0.0
    %518 = vmatprep.subr.mxu0 0.0
    %519 = vmatpush1.msra.mxu0 0.0
    %520 = vmatprep.subr.mxu0 0.0
    %521 = vmatpush1.msra.mxu0 0.0
    %522 = vmatprep.subr.mxu0 0.0
    %523 = vmatpush1.msra.mxu0 0.0
    %524 = vmatprep.subr.mxu0 0.0
    %525 = vmatpush1.msra.mxu0 0.0
    %526 = vmatprep.subr.mxu0 0.0
    %527 = vmatpush1.msra.mxu0 0.0
    %528 = vmatprep.mubr.f32.mxu0 0.0
    %529 = vmatmul.mubr.f32.gmra.mrb[0].mxu0 %v462
    %v530 = vpop.f32.mrb[0].mxu0
    %v531 = vadd.f32 0.0, %v530
    %v532 = vpop.f32.mrb[0].mxu0
    %533 = vdwg.mxu0
    %v534 = vadd.f32 %v208, %v531
    %v535 = vxor.u32 %v534, 2147483648
    %v536 = vmul.f32 %v535, 1.442695
    %v537 = vpow.pop %v536
    %v538 = vadd.f32 %v537, 1.0
    %v539 = vrcp.pop %v538
    %v540 = vmul.f32 1.0, %v539
    %v541 = vtanh.pop %v534
    %v542 = vmul.f32 %v540, %v442
    %544 = vrot.lane.b32.xlu0 %v541, 32
    %v545 = vpop.permute.xlu0 %544
    %v547 = vmul.f32 %v540, %v545
    %549 = vrot.lane.b32.xlu0 %v547, 32
    %v550 = vpop.permute.xlu0 %549
    %v552 = vadd.f32 %v542, %v550
    %v553 = vtanh.pop %v552
    %555 = vrot.lane.b32.xlu0 %v553, 32
    %v556 = vpop.permute.xlu0 %555
    %v558 = vmul.f32 %v540, %v556
    %v561 = vunpack.c.l.s4 1983009808
    %v562 = vunpack.c.0.s8 %v561
    %v563 = vlaneseq
    %v564 = vshrl.u32 %v563, 7
    %v565 = vsub.s32 %v562, %v564
    %v566 = vrot.slane %v558, %v565
    %567 = vrot.lane.b32.xlu0 %v566, 64
    %v568 = vpop.permute.xlu0 %567
    %s570 = scalar_lea.vmem [#allocation2], 4
    %571 = vst.msk [vmem:[%s570] sm:$0x3] %vm350, %v568
    %v572 = vsel %vm240, %v568, 0
    %574 = vmatprep.subr.mxu0 0.0
    %575 = vmatpush1.msra.mxu0 %v236
    %576 = vmatprep.subr.mxu0 0.0
    %577 = vmatpush1.msra.mxu0 %v237
    %578 = vmatprep.subr.mxu0 0.0
    %579 = vmatpush1.msra.mxu0 %v238
    %580 = vmatprep.subr.mxu0 0.0
    %581 = vmatpush1.msra.mxu0 %v239
    %582 = vmatprep.subr.mxu0 0.0
    %583 = vmatpush1.msra.mxu0 0.0
    %584 = vmatprep.subr.mxu0 0.0
    %585 = vmatpush1.msra.mxu0 0.0
    %586 = vmatprep.subr.mxu0 0.0
    %587 = vmatpush1.msra.mxu0 0.0
    %588 = vmatprep.subr.mxu0 0.0
    %589 = vmatpush1.msra.mxu0 0.0
    %590 = vmatprep.subr.mxu0 0.0
    %591 = vmatpush1.msra.mxu0 0.0
    %592 = vmatprep.subr.mxu0 0.0
    %593 = vmatpush1.msra.mxu0 0.0
    %594 = vmatprep.subr.mxu0 0.0
    %595 = vmatpush1.msra.mxu0 0.0
    %596 = vmatprep.subr.mxu0 0.0
    %597 = vmatpush1.msra.mxu0 0.0
    %598 = vmatprep.subr.mxu0 0.0
    %599 = vmatpush1.msra.mxu0 0.0
    %600 = vmatprep.subr.mxu0 0.0
    %601 = vmatpush1.msra.mxu0 0.0
    %602 = vmatprep.subr.mxu0 0.0
    %603 = vmatpush1.msra.mxu0 0.0
    %604 = vmatprep.subr.mxu0 0.0
    %605 = vmatpush1.msra.mxu0 0.0
    %606 = vmatprep.subr.mxu0 0.0
    %607 = vmatpush1.msra.mxu0 0.0
    %608 = vmatprep.subr.mxu0 0.0
    %609 = vmatpush1.msra.mxu0 0.0
    %610 = vmatprep.subr.mxu0 0.0
    %611 = vmatpush1.msra.mxu0 0.0
    %612 = vmatprep.subr.mxu0 0.0
    %613 = vmatpush1.msra.mxu0 0.0
    %614 = vmatprep.subr.mxu0 0.0
    %615 = vmatpush1.msra.mxu0 0.0
    %616 = vmatprep.subr.mxu0 0.0
    %617 = vmatpush1.msra.mxu0 0.0
    %618 = vmatprep.subr.mxu0 0.0
    %619 = vmatpush1.msra.mxu0 0.0
    %620 = vmatprep.subr.mxu0 0.0
    %621 = vmatpush1.msra.mxu0 0.0
    %622 = vmatprep.subr.mxu0 0.0
    %623 = vmatpush1.msra.mxu0 0.0
    %624 = vmatprep.subr.mxu0 0.0
    %625 = vmatpush1.msra.mxu0 0.0
    %626 = vmatprep.subr.mxu0 0.0
    %627 = vmatpush1.msra.mxu0 0.0
    %628 = vmatprep.subr.mxu0 0.0
    %629 = vmatpush1.msra.mxu0 0.0
    %630 = vmatprep.subr.mxu0 0.0
    %631 = vmatpush1.msra.mxu0 0.0
    %632 = vmatprep.subr.mxu0 0.0
    %633 = vmatpush1.msra.mxu0 0.0
    %634 = vmatprep.subr.mxu0 0.0
    %635 = vmatpush1.msra.mxu0 0.0
    %636 = vmatprep.subr.mxu0 0.0
    %637 = vmatpush1.msra.mxu0 0.0
    %638 = vmatprep.mubr.f32.mxu0 0.0
    %639 = vmatmul.mubr.f32.gmra.mrb[0].mxu0 %v572
    %v640 = vpop.f32.mrb[0].mxu0
    %v641 = vadd.f32 0.0, %v640
    %v642 = vpop.f32.mrb[0].mxu0
    %643 = vdwg.mxu0
    %v644 = vadd.f32 %v210, %v641
    %v645 = vxor.u32 %v644, 2147483648
    %v646 = vmul.f32 %v645, 1.442695
    %v647 = vpow.pop %v646
    %v648 = vadd.f32 %v647, 1.0
    %v649 = vrcp.pop %v648
    %v650 = vmul.f32 1.0, %v649
    %v651 = vtanh.pop %v644
    %v652 = vmul.f32 %v650, %v552
    %654 = vrot.lane.b32.xlu0 %v651, 32
    %v655 = vpop.permute.xlu0 %654
    %v657 = vmul.f32 %v650, %v655
    %659 = vrot.lane.b32.xlu0 %v657, 32
    %v660 = vpop.permute.xlu0 %659
    %v662 = vadd.f32 %v652, %v660
    %v663 = vtanh.pop %v662
    %665 = vrot.lane.b32.xlu0 %v663, 32
    %v666 = vpop.permute.xlu0 %665
    %v668 = vmul.f32 %v650, %v666
    %v671 = vunpack.c.l.s4 1983009808
    %v672 = vunpack.c.0.s8 %v671
    %v673 = vlaneseq
    %v674 = vshrl.u32 %v673, 7
    %v675 = vsub.s32 %v672, %v674
    %v676 = vrot.slane %v668, %v675
    %677 = vrot.lane.b32.xlu0 %v676, 64
    %v678 = vpop.permute.xlu0 %677
    %s680 = scalar_lea.vmem [#allocation2], 6
    %681 = vst.msk [vmem:[%s680] sm:$0x3] %vm350, %v678
    %v682 = vsel %vm240, %v678, 0
    %684 = vmatprep.subr.mxu0 0.0
    %685 = vmatpush1.msra.mxu0 %v236
    %686 = vmatprep.subr.mxu0 0.0
    %687 = vmatpush1.msra.mxu0 %v237
    %688 = vmatprep.subr.mxu0 0.0
    %689 = vmatpush1.msra.mxu0 %v238
    %690 = vmatprep.subr.mxu0 0.0
    %691 = vmatpush1.msra.mxu0 %v239
    %692 = vmatprep.subr.mxu0 0.0
    %693 = vmatpush1.msra.mxu0 0.0
    %694 = vmatprep.subr.mxu0 0.0
    %695 = vmatpush1.msra.mxu0 0.0
    %696 = vmatprep.subr.mxu0 0.0
    %697 = vmatpush1.msra.mxu0 0.0
    %698 = vmatprep.subr.mxu0 0.0
    %699 = vmatpush1.msra.mxu0 0.0
    %700 = vmatprep.subr.mxu0 0.0
    %701 = vmatpush1.msra.mxu0 0.0
    %702 = vmatprep.subr.mxu0 0.0
    %703 = vmatpush1.msra.mxu0 0.0
    %704 = vmatprep.subr.mxu0 0.0
    %705 = vmatpush1.msra.mxu0 0.0
    %706 = vmatprep.subr.mxu0 0.0
    %707 = vmatpush1.msra.mxu0 0.0
    %708 = vmatprep.subr.mxu0 0.0
    %709 = vmatpush1.msra.mxu0 0.0
    %710 = vmatprep.subr.mxu0 0.0
    %711 = vmatpush1.msra.mxu0 0.0
    %712 = vmatprep.subr.mxu0 0.0
    %713 = vmatpush1.msra.mxu0 0.0
    %714 = vmatprep.subr.mxu0 0.0
    %715 = vmatpush1.msra.mxu0 0.0
    %716 = vmatprep.subr.mxu0 0.0
    %717 = vmatpush1.msra.mxu0 0.0
    %718 = vmatprep.subr.mxu0 0.0
    %719 = vmatpush1.msra.mxu0 0.0
    %720 = vmatprep.subr.mxu0 0.0
    %721 = vmatpush1.msra.mxu0 0.0
    %722 = vmatprep.subr.mxu0 0.0
    %723 = vmatpush1.msra.mxu0 0.0
    %724 = vmatprep.subr.mxu0 0.0
    %725 = vmatpush1.msra.mxu0 0.0
    %726 = vmatprep.subr.mxu0 0.0
    %727 = vmatpush1.msra.mxu0 0.0
    %728 = vmatprep.subr.mxu0 0.0
    %729 = vmatpush1.msra.mxu0 0.0
    %730 = vmatprep.subr.mxu0 0.0
    %731 = vmatpush1.msra.mxu0 0.0
    %732 = vmatprep.subr.mxu0 0.0
    %733 = vmatpush1.msra.mxu0 0.0
    %734 = vmatprep.subr.mxu0 0.0
    %735 = vmatpush1.msra.mxu0 0.0
    %736 = vmatprep.subr.mxu0 0.0
    %737 = vmatpush1.msra.mxu0 0.0
    %738 = vmatprep.subr.mxu0 0.0
    %739 = vmatpush1.msra.mxu0 0.0
    %740 = vmatprep.subr.mxu0 0.0
    %741 = vmatpush1.msra.mxu0 0.0
    %742 = vmatprep.subr.mxu0 0.0
    %743 = vmatpush1.msra.mxu0 0.0
    %744 = vmatprep.subr.mxu0 0.0
    %745 = vmatpush1.msra.mxu0 0.0
    %746 = vmatprep.subr.mxu0 0.0
    %747 = vmatpush1.msra.mxu0 0.0
    %748 = vmatprep.mubr.f32.mxu0 0.0
    %749 = vmatmul.mubr.f32.gmra.mrb[0].mxu0 %v682
    %v750 = vpop.f32.mrb[0].mxu0
    %v751 = vadd.f32 0.0, %v750
    %v752 = vpop.f32.mrb[0].mxu0
    %753 = vdwg.mxu0
    %v754 = vadd.f32 %v218, %v751
    %v755 = vxor.u32 %v754, 2147483648
    %v756 = vmul.f32 %v755, 1.442695
    %v757 = vpow.pop %v756
    %v758 = vadd.f32 %v757, 1.0
    %v759 = vrcp.pop %v758
    %v760 = vmul.f32 1.0, %v759
    %v761 = vtanh.pop %v754
    %v762 = vmul.f32 %v760, %v662
    %764 = vrot.lane.b32.xlu0 %v761, 32
    %v765 = vpop.permute.xlu0 %764
    %v767 = vmul.f32 %v760, %v765
    %769 = vrot.lane.b32.xlu0 %v767, 32
    %v770 = vpop.permute.xlu0 %769
    %v772 = vadd.f32 %v762, %v770
    %v773 = vtanh.pop %v772
    %775 = vrot.lane.b32.xlu0 %v773, 32
    %v776 = vpop.permute.xlu0 %775
    %v778 = vmul.f32 %v760, %v776
    %v781 = vunpack.c.l.s4 1983009808
    %v782 = vunpack.c.0.s8 %v781
    %v783 = vlaneseq
    %v784 = vshrl.u32 %v783, 7
    %v785 = vsub.s32 %v782, %v784
    %v786 = vrot.slane %v778, %v785
    %787 = vrot.lane.b32.xlu0 %v786, 64
    %v788 = vpop.permute.xlu0 %787
    %s790 = scalar_lea.vmem [#allocation2], 8
    %791 = vst.msk [vmem:[%s790] sm:$0x3] %vm350, %v788
    %v792 = vsel %vm240, %v788, 0
    %794 = vmatprep.subr.mxu0 0.0
    %795 = vmatpush1.msra.mxu0 %v236
    %796 = vmatprep.subr.mxu0 0.0
    %797 = vmatpush1.msra.mxu0 %v237
    %798 = vmatprep.subr.mxu0 0.0
    %799 = vmatpush1.msra.mxu0 %v238
    %800 = vmatprep.subr.mxu0 0.0
    %801 = vmatpush1.msra.mxu0 %v239
    %802 = vmatprep.subr.mxu0 0.0
    %803 = vmatpush1.msra.mxu0 0.0
    %804 = vmatprep.subr.mxu0 0.0
    %805 = vmatpush1.msra.mxu0 0.0
    %806 = vmatprep.subr.mxu0 0.0
    %807 = vmatpush1.msra.mxu0 0.0
    %808 = vmatprep.subr.mxu0 0.0
    %809 = vmatpush1.msra.mxu0 0.0
    %810 = vmatprep.subr.mxu0 0.0
    %811 = vmatpush1.msra.mxu0 0.0
    %812 = vmatprep.subr.mxu0 0.0
    %813 = vmatpush1.msra.mxu0 0.0
    %814 = vmatprep.subr.mxu0 0.0
    %815 = vmatpush1.msra.mxu0 0.0
    %816 = vmatprep.subr.mxu0 0.0
    %817 = vmatpush1.msra.mxu0 0.0
    %818 = vmatprep.subr.mxu0 0.0
    %819 = vmatpush1.msra.mxu0 0.0
    %820 = vmatprep.subr.mxu0 0.0
    %821 = vmatpush1.msra.mxu0 0.0
    %822 = vmatprep.subr.mxu0 0.0
    %823 = vmatpush1.msra.mxu0 0.0
    %824 = vmatprep.subr.mxu0 0.0
    %825 = vmatpush1.msra.mxu0 0.0
    %826 = vmatprep.subr.mxu0 0.0
    %827 = vmatpush1.msra.mxu0 0.0
    %828 = vmatprep.subr.mxu0 0.0
    %829 = vmatpush1.msra.mxu0 0.0
    %830 = vmatprep.subr.mxu0 0.0
    %831 = vmatpush1.msra.mxu0 0.0
    %832 = vmatprep.subr.mxu0 0.0
    %833 = vmatpush1.msra.mxu0 0.0
    %834 = vmatprep.subr.mxu0 0.0
    %835 = vmatpush1.msra.mxu0 0.0
    %836 = vmatprep.subr.mxu0 0.0
    %837 = vmatpush1.msra.mxu0 0.0
    %838 = vmatprep.subr.mxu0 0.0
    %839 = vmatpush1.msra.mxu0 0.0
    %840 = vmatprep.subr.mxu0 0.0
    %841 = vmatpush1.msra.mxu0 0.0
    %842 = vmatprep.subr.mxu0 0.0
    %843 = vmatpush1.msra.mxu0 0.0
    %844 = vmatprep.subr.mxu0 0.0
    %845 = vmatpush1.msra.mxu0 0.0
    %846 = vmatprep.subr.mxu0 0.0
    %847 = vmatpush1.msra.mxu0 0.0
    %848 = vmatprep.subr.mxu0 0.0
    %849 = vmatpush1.msra.mxu0 0.0
    %850 = vmatprep.subr.mxu0 0.0
    %851 = vmatpush1.msra.mxu0 0.0
    %852 = vmatprep.subr.mxu0 0.0
    %853 = vmatpush1.msra.mxu0 0.0
    %854 = vmatprep.subr.mxu0 0.0
    %855 = vmatpush1.msra.mxu0 0.0
    %856 = vmatprep.subr.mxu0 0.0
    %857 = vmatpush1.msra.mxu0 0.0
    %858 = vmatprep.mubr.f32.mxu0 0.0
    %859 = vmatmul.mubr.f32.gmra.mrb[0].mxu0 %v792
    %v860 = vpop.f32.mrb[0].mxu0
    %v861 = vadd.f32 0.0, %v860
    %v862 = vpop.f32.mrb[0].mxu0
    %863 = vdwg.mxu0
    %v864 = vadd.f32 %v226, %v861
    %v865 = vxor.u32 %v864, 2147483648
    %v866 = vmul.f32 %v865, 1.442695
    %v867 = vpow.pop %v866
    %v868 = vadd.f32 %v867, 1.0
    %v869 = vrcp.pop %v868
    %v870 = vmul.f32 1.0, %v869
    %v871 = vtanh.pop %v864
    %v872 = vmul.f32 %v870, %v772
    %874 = vrot.lane.b32.xlu0 %v871, 32
    %v875 = vpop.permute.xlu0 %874
    %v877 = vmul.f32 %v870, %v875
    %879 = vrot.lane.b32.xlu0 %v877, 32
    %v880 = vpop.permute.xlu0 %879
    %v882 = vadd.f32 %v872, %v880
    %v883 = vtanh.pop %v882
    %885 = vrot.lane.b32.xlu0 %v883, 32
    %v886 = vpop.permute.xlu0 %885
    %v888 = vmul.f32 %v870, %v886
    %v891 = vunpack.c.l.s4 1983009808
    %v892 = vunpack.c.0.s8 %v891
    %v893 = vlaneseq
    %v894 = vshrl.u32 %v893, 7
    %v895 = vsub.s32 %v892, %v894
    %v896 = vrot.slane %v888, %v895
    %897 = vrot.lane.b32.xlu0 %v896, 64
    %v898 = vpop.permute.xlu0 %897
    %s900 = scalar_lea.vmem [#allocation2], 10
    %901 = vst.msk [vmem:[%s900] sm:$0x3] %vm350, %v898
    %v902 = vsel %vm240, %v898, 0
    %904 = vmatprep.subr.mxu0 0.0
    %905 = vmatpush1.msra.mxu0 %v236
    %906 = vmatprep.subr.mxu0 0.0
    %907 = vmatpush1.msra.mxu0 %v237
    %908 = vmatprep.subr.mxu0 0.0
    %909 = vmatpush1.msra.mxu0 %v238
    %910 = vmatprep.subr.mxu0 0.0
    %911 = vmatpush1.msra.mxu0 %v239
    %912 = vmatprep.subr.mxu0 0.0
    %913 = vmatpush1.msra.mxu0 0.0
    %914 = vmatprep.subr.mxu0 0.0
    %915 = vmatpush1.msra.mxu0 0.0
    %916 = vmatprep.subr.mxu0 0.0
    %917 = vmatpush1.msra.mxu0 0.0
    %918 = vmatprep.subr.mxu0 0.0
    %919 = vmatpush1.msra.mxu0 0.0
    %920 = vmatprep.subr.mxu0 0.0
    %921 = vmatpush1.msra.mxu0 0.0
    %922 = vmatprep.subr.mxu0 0.0
    %923 = vmatpush1.msra.mxu0 0.0
    %924 = vmatprep.subr.mxu0 0.0
    %925 = vmatpush1.msra.mxu0 0.0
    %926 = vmatprep.subr.mxu0 0.0
    %927 = vmatpush1.msra.mxu0 0.0
    %928 = vmatprep.subr.mxu0 0.0
    %929 = vmatpush1.msra.mxu0 0.0
    %930 = vmatprep.subr.mxu0 0.0
    %931 = vmatpush1.msra.mxu0 0.0
    %932 = vmatprep.subr.mxu0 0.0
    %933 = vmatpush1.msra.mxu0 0.0
    %934 = vmatprep.subr.mxu0 0.0
    %935 = vmatpush1.msra.mxu0 0.0
    %936 = vmatprep.subr.mxu0 0.0
    %937 = vmatpush1.msra.mxu0 0.0
    %938 = vmatprep.subr.mxu0 0.0
    %939 = vmatpush1.msra.mxu0 0.0
    %940 = vmatprep.subr.mxu0 0.0
    %941 = vmatpush1.msra.mxu0 0.0
    %942 = vmatprep.subr.mxu0 0.0
    %943 = vmatpush1.msra.mxu0 0.0
    %944 = vmatprep.subr.mxu0 0.0
    %945 = vmatpush1.msra.mxu0 0.0
    %946 = vmatprep.subr.mxu0 0.0
    %947 = vmatpush1.msra.mxu0 0.0
    %948 = vmatprep.subr.mxu0 0.0
    %949 = vmatpush1.msra.mxu0 0.0
    %950 = vmatprep.subr.mxu0 0.0
    %951 = vmatpush1.msra.mxu0 0.0
    %952 = vmatprep.subr.mxu0 0.0
    %953 = vmatpush1.msra.mxu0 0.0
    %954 = vmatprep.subr.mxu0 0.0
    %955 = vmatpush1.msra.mxu0 0.0
    %956 = vmatprep.subr.mxu0 0.0
    %957 = vmatpush1.msra.mxu0 0.0
    %958 = vmatprep.subr.mxu0 0.0
    %959 = vmatpush1.msra.mxu0 0.0
    %960 = vmatprep.subr.mxu0 0.0
    %961 = vmatpush1.msra.mxu0 0.0
    %962 = vmatprep.subr.mxu0 0.0
    %963 = vmatpush1.msra.mxu0 0.0
    %964 = vmatprep.subr.mxu0 0.0
    %965 = vmatpush1.msra.mxu0 0.0
    %966 = vmatprep.subr.mxu0 0.0
    %967 = vmatpush1.msra.mxu0 0.0
    %968 = vmatprep.mubr.f32.mxu0 0.0
    %969 = vmatmul.mubr.f32.gmra.mrb[0].mxu0 %v902
    %v970 = vpop.f32.mrb[0].mxu0
    %v971 = vadd.f32 0.0, %v970
    %v972 = vpop.f32.mrb[0].mxu0
    %973 = vdwg.mxu0
    %v974 = vadd.f32 %v225, %v971
    %v975 = vxor.u32 %v974, 2147483648
    %v976 = vmul.f32 %v975, 1.442695
    %v977 = vpow.pop %v976
    %v978 = vadd.f32 %v977, 1.0
    %v979 = vrcp.pop %v978
    %v980 = vmul.f32 1.0, %v979
    %v981 = vtanh.pop %v974
    %v982 = vmul.f32 %v980, %v882
    %984 = vrot.lane.b32.xlu0 %v981, 32
    %v985 = vpop.permute.xlu0 %984
    %v987 = vmul.f32 %v980, %v985
    %989 = vrot.lane.b32.xlu0 %v987, 32
    %v990 = vpop.permute.xlu0 %989
    %v992 = vadd.f32 %v982, %v990
    %v993 = vtanh.pop %v992
    %995 = vrot.lane.b32.xlu0 %v993, 32
    %v996 = vpop.permute.xlu0 %995
    %v998 = vmul.f32 %v980, %v996
    %v1001 = vunpack.c.l.s4 1983009808
    %v1002 = vunpack.c.0.s8 %v1001
    %v1003 = vlaneseq
    %v1004 = vshrl.u32 %v1003, 7
    %v1005 = vsub.s32 %v1002, %v1004
    %v1006 = vrot.slane %v998, %v1005
    %1007 = vrot.lane.b32.xlu0 %v1006, 64
    %v1008 = vpop.permute.xlu0 %1007
    %s1010 = scalar_lea.vmem [#allocation2], 12
    %1011 = vst.msk [vmem:[%s1010] sm:$0x3] %vm350, %v1008
    %v1012 = vsel %vm240, %v1008, 0
    %1014 = vmatprep.subr.mxu0 0.0
    %1015 = vmatpush1.msra.mxu0 %v236
    %1016 = vmatprep.subr.mxu0 0.0
    %1017 = vmatpush1.msra.mxu0 %v237
    %1018 = vmatprep.subr.mxu0 0.0
    %1019 = vmatpush1.msra.mxu0 %v238
    %1020 = vmatprep.subr.mxu0 0.0
    %1021 = vmatpush1.msra.mxu0 %v239
    %1022 = vmatprep.subr.mxu0 0.0
    %1023 = vmatpush1.msra.mxu0 0.0
    %1024 = vmatprep.subr.mxu0 0.0
    %1025 = vmatpush1.msra.mxu0 0.0
    %1026 = vmatprep.subr.mxu0 0.0
    %1027 = vmatpush1.msra.mxu0 0.0
    %1028 = vmatprep.subr.mxu0 0.0
    %1029 = vmatpush1.msra.mxu0 0.0
    %1030 = vmatprep.subr.mxu0 0.0
    %1031 = vmatpush1.msra.mxu0 0.0
    %1032 = vmatprep.subr.mxu0 0.0
    %1033 = vmatpush1.msra.mxu0 0.0
    %1034 = vmatprep.subr.mxu0 0.0
    %1035 = vmatpush1.msra.mxu0 0.0
    %1036 = vmatprep.subr.mxu0 0.0
    %1037 = vmatpush1.msra.mxu0 0.0
    %1038 = vmatprep.subr.mxu0 0.0
    %1039 = vmatpush1.msra.mxu0 0.0
    %1040 = vmatprep.subr.mxu0 0.0
    %1041 = vmatpush1.msra.mxu0 0.0
    %1042 = vmatprep.subr.mxu0 0.0
    %1043 = vmatpush1.msra.mxu0 0.0
    %1044 = vmatprep.subr.mxu0 0.0
    %1045 = vmatpush1.msra.mxu0 0.0
    %1046 = vmatprep.subr.mxu0 0.0
    %1047 = vmatpush1.msra.mxu0 0.0
    %1048 = vmatprep.subr.mxu0 0.0
    %1049 = vmatpush1.msra.mxu0 0.0
    %1050 = vmatprep.subr.mxu0 0.0
    %1051 = vmatpush1.msra.mxu0 0.0
    %1052 = vmatprep.subr.mxu0 0.0
    %1053 = vmatpush1.msra.mxu0 0.0
    %1054 = vmatprep.subr.mxu0 0.0
    %1055 = vmatpush1.msra.mxu0 0.0
    %1056 = vmatprep.subr.mxu0 0.0
    %1057 = vmatpush1.msra.mxu0 0.0
    %1058 = vmatprep.subr.mxu0 0.0
    %1059 = vmatpush1.msra.mxu0 0.0
    %1060 = vmatprep.subr.mxu0 0.0
    %1061 = vmatpush1.msra.mxu0 0.0
    %1062 = vmatprep.subr.mxu0 0.0
    %1063 = vmatpush1.msra.mxu0 0.0
    %1064 = vmatprep.subr.mxu0 0.0
    %1065 = vmatpush1.msra.mxu0 0.0
    %1066 = vmatprep.subr.mxu0 0.0
    %1067 = vmatpush1.msra.mxu0 0.0
    %1068 = vmatprep.subr.mxu0 0.0
    %1069 = vmatpush1.msra.mxu0 0.0
    %1070 = vmatprep.subr.mxu0 0.0
    %1071 = vmatpush1.msra.mxu0 0.0
    %1072 = vmatprep.subr.mxu0 0.0
    %1073 = vmatpush1.msra.mxu0 0.0
    %1074 = vmatprep.subr.mxu0 0.0
    %1075 = vmatpush1.msra.mxu0 0.0
    %1076 = vmatprep.subr.mxu0 0.0
    %1077 = vmatpush1.msra.mxu0 0.0
    %1078 = vmatprep.mubr.f32.mxu0 0.0
    %1079 = vmatmul.mubr.f32.gmra.mrb[0].mxu0 %v1012
    %v1080 = vpop.f32.mrb[0].mxu0
    %v1081 = vadd.f32 0.0, %v1080
    %v1082 = vpop.f32.mrb[0].mxu0
    %1083 = vdwg.mxu0
    %v1084 = vadd.f32 %v227, %v1081
    %v1085 = vxor.u32 %v1084, 2147483648
    %v1086 = vmul.f32 %v1085, 1.442695
    %v1087 = vpow.pop %v1086
    %v1088 = vadd.f32 %v1087, 1.0
    %v1089 = vrcp.pop %v1088
    %v1090 = vmul.f32 1.0, %v1089
    %v1091 = vtanh.pop %v1084
    %v1092 = vmul.f32 %v1090, %v992
    %1094 = vrot.lane.b32.xlu0 %v1091, 32
    %v1095 = vpop.permute.xlu0 %1094
    %v1097 = vmul.f32 %v1090, %v1095
    %1099 = vrot.lane.b32.xlu0 %v1097, 32
    %v1100 = vpop.permute.xlu0 %1099
    %v1102 = vadd.f32 %v1092, %v1100
    %v1103 = vtanh.pop %v1102
    %1105 = vrot.lane.b32.xlu0 %v1103, 32
    %v1106 = vpop.permute.xlu0 %1105
    %v1108 = vmul.f32 %v1090, %v1106
    %v1111 = vunpack.c.l.s4 1983009808
    %v1112 = vunpack.c.0.s8 %v1111
    %v1113 = vlaneseq
    %v1114 = vshrl.u32 %v1113, 7
    %v1115 = vsub.s32 %v1112, %v1114
    %v1116 = vrot.slane %v1108, %v1115
    %1117 = vrot.lane.b32.xlu0 %v1116, 64
    %v1118 = vpop.permute.xlu0 %1117
    %s1120 = scalar_lea.vmem [#allocation2], 14
    %1121 = vst.msk [vmem:[%s1120] sm:$0x3] %vm350, %v1118
    %v1122 = vld [vmem:[#allocation2] sm:$0x3]
    %v1123 = vld [vmem:[#allocation2 + $0x2] sm:$0x3]
    %v1124 = vld [vmem:[#allocation2 + $0x4] sm:$0x3]
    %v1125 = vld [vmem:[#allocation2 + $0x6] sm:$0x3]
    %v1126 = vld [vmem:[#allocation2 + $0x8] sm:$0x3]
    %v1127 = vld [vmem:[#allocation2 + $0xa] sm:$0x3]
    %v1128 = vld [vmem:[#allocation2 + $0xc] sm:$0x3]
    %v1129 = vld [vmem:[#allocation2 + $0xe] sm:$0x3]
    %v1130 = vld [vmem:[%s4] sm:$0xff]
    %v1131 = vld [vmem:[%s4 + $0x8] sm:$0xff]
    %v1132 = vld [vmem:[%s4 + $0x10] sm:$0xff]
    %v1133 = vld [vmem:[%s4 + $0x18] sm:$0xff]
    %v1134 = vld [vmem:[#allocation3] sm:$0x1]
    %v1136 = vlaneseq
    %v1137 = vshrl.u32 %v1136, 7
    %v1138 = vsub.s32 0, %v1137
    %v1139 = vrot.slane %v1134, %v1138
    %v1149 = vcombine.low %v1122, %v1123
    %v1150 = vcombine.low %v1124, %v1125
    %v1152 = vunpack.c.l.s4 1983009808
    %v1153 = vunpack.c.0.s8 %v1152
    %v1154 = vlaneseq
    %v1155 = vshrl.u32 %v1154, 7
    %v1156 = vsub.s32 %v1153, %v1155
    %v1157 = vrot.slane %v1149, %v1156
    %v1159 = vunpack.c.l.s4 1983009808
    %v1160 = vunpack.c.0.s8 %v1159
    %v1161 = vlaneseq
    %v1162 = vshrl.u32 %v1161, 7
    %v1163 = vsub.s32 %v1160, %v1162
    %v1164 = vrot.slane %v1150, %v1163
    %v1165 = vcombine.low %v1157, %v1164
    %v1166 = vcombine.low %v1126, %v1127
    %v1167 = vcombine.low %v1128, %v1129
    %v1169 = vunpack.c.l.s4 1983009808
    %v1170 = vunpack.c.0.s8 %v1169
    %v1171 = vlaneseq
    %v1172 = vshrl.u32 %v1171, 7
    %v1173 = vsub.s32 %v1170, %v1172
    %v1174 = vrot.slane %v1166, %v1173
    %v1176 = vunpack.c.l.s4 1983009808
    %v1177 = vunpack.c.0.s8 %v1176
    %v1178 = vlaneseq
    %v1179 = vshrl.u32 %v1178, 7
    %v1180 = vsub.s32 %v1177, %v1179
    %v1181 = vrot.slane %v1167, %v1180
    %v1182 = vcombine.low %v1174, %v1181
    %v1183 = vsel %vm240, %v1165, 0
    %v1185 = vsel %vm240, %v1182, 0
    %1187 = vmatprep.subr.mxu0 0.0
    %1188 = vmatpush1.msra.mxu0 %v1130
    %1189 = vmatprep.subr.mxu0 0.0
    %1190 = vmatpush1.msra.mxu0 %v1131
    %1191 = vmatprep.subr.mxu0 0.0
    %1192 = vmatpush1.msra.mxu0 %v1132
    %1193 = vmatprep.subr.mxu0 0.0
    %1194 = vmatpush1.msra.mxu0 %v1133
    %1195 = vmatprep.subr.mxu0 0.0
    %1196 = vmatpush1.msra.mxu0 0.0
    %1197 = vmatprep.subr.mxu0 0.0
    %1198 = vmatpush1.msra.mxu0 0.0
    %1199 = vmatprep.subr.mxu0 0.0
    %1200 = vmatpush1.msra.mxu0 0.0
    %1201 = vmatprep.subr.mxu0 0.0
    %1202 = vmatpush1.msra.mxu0 0.0
    %1203 = vmatprep.subr.mxu0 0.0
    %1204 = vmatpush1.msra.mxu0 0.0
    %1205 = vmatprep.subr.mxu0 0.0
    %1206 = vmatpush1.msra.mxu0 0.0
    %1207 = vmatprep.subr.mxu0 0.0
    %1208 = vmatpush1.msra.mxu0 0.0
    %1209 = vmatprep.subr.mxu0 0.0
    %1210 = vmatpush1.msra.mxu0 0.0
    %1211 = vmatprep.subr.mxu0 0.0
    %1212 = vmatpush1.msra.mxu0 0.0
    %1213 = vmatprep.subr.mxu0 0.0
    %1214 = vmatpush1.msra.mxu0 0.0
    %1215 = vmatprep.subr.mxu0 0.0
    %1216 = vmatpush1.msra.mxu0 0.0
    %1217 = vmatprep.subr.mxu0 0.0
    %1218 = vmatpush1.msra.mxu0 0.0
    %1219 = vmatprep.subr.mxu0 0.0
    %1220 = vmatpush1.msra.mxu0 0.0
    %1221 = vmatprep.subr.mxu0 0.0
    %1222 = vmatpush1.msra.mxu0 0.0
    %1223 = vmatprep.subr.mxu0 0.0
    %1224 = vmatpush1.msra.mxu0 0.0
    %1225 = vmatprep.subr.mxu0 0.0
    %1226 = vmatpush1.msra.mxu0 0.0
    %1227 = vmatprep.subr.mxu0 0.0
    %1228 = vmatpush1.msra.mxu0 0.0
    %1229 = vmatprep.subr.mxu0 0.0
    %1230 = vmatpush1.msra.mxu0 0.0
    %1231 = vmatprep.subr.mxu0 0.0
    %1232 = vmatpush1.msra.mxu0 0.0
    %1233 = vmatprep.subr.mxu0 0.0
    %1234 = vmatpush1.msra.mxu0 0.0
    %1235 = vmatprep.subr.mxu0 0.0
    %1236 = vmatpush1.msra.mxu0 0.0
    %1237 = vmatprep.subr.mxu0 0.0
    %1238 = vmatpush1.msra.mxu0 0.0
    %1239 = vmatprep.subr.mxu0 0.0
    %1240 = vmatpush1.msra.mxu0 0.0
    %1241 = vmatprep.subr.mxu0 0.0
    %1242 = vmatpush1.msra.mxu0 0.0
    %1243 = vmatprep.subr.mxu0 0.0
    %1244 = vmatpush1.msra.mxu0 0.0
    %1245 = vmatprep.subr.mxu0 0.0
    %1246 = vmatpush1.msra.mxu0 0.0
    %1247 = vmatprep.subr.mxu0 0.0
    %1248 = vmatpush1.msra.mxu0 0.0
    %1249 = vmatprep.subr.mxu0 0.0
    %1250 = vmatpush1.msra.mxu0 0.0
    %1251 = vmatprep.mubr.f32.mxu0 0.0
    %1252 = vmatmul.mubr.f32.gmra.mrb[0].mxu0 %v1183
    %v1253 = vpop.f32.mrb[0].mxu0
    %v1254 = vadd.f32 %v1139, %v1253
    %v1255 = vpop.f32.mrb[0].mxu0
    %1256 = vmatprep.mubr.f32.mxu0 0.0
    %1257 = vmatmul.mubr.f32.gmra.mrb[0].mxu0 %v1185
    %v1258 = vpop.f32.mrb[0].mxu0
    %v1259 = vadd.f32 %v1139, %v1258
    %v1260 = vpop.f32.mrb[0].mxu0
    %1261 = vdwg.mxu0
    %v1264 = vcombine.high %v1254, %v1254
    %v1266 = vunpack.c.l.s4 1983009808
    %v1267 = vunpack.c.0.s8 %v1266
    %v1268 = vlaneseq
    %v1269 = vshrl.u32 %v1268, 7
    %v1270 = vsub.s32 %v1267, %v1269
    %v1271 = vrot.slane %v1254, %v1270
    %v1273 = vunpack.c.l.s4 1983009808
    %v1274 = vunpack.c.0.s8 %v1273
    %v1275 = vlaneseq
    %v1276 = vshrl.u32 %v1275, 7
    %v1277 = vsub.s32 %v1274, %v1276
    %v1278 = vrot.slane %v1264, %v1277
    %v1279 = vcombine.high %v1271, %v1271
    %v1280 = vcombine.high %v1278, %v1278
    %v1281 = vcombine.high %v1259, %v1259
    %v1283 = vunpack.c.l.s4 1983009808
    %v1284 = vunpack.c.0.s8 %v1283
    %v1285 = vlaneseq
    %v1286 = vshrl.u32 %v1285, 7
    %v1287 = vsub.s32 %v1284, %v1286
    %v1288 = vrot.slane %v1259, %v1287
    %v1290 = vunpack.c.l.s4 1983009808
    %v1291 = vunpack.c.0.s8 %v1290
    %v1292 = vlaneseq
    %v1293 = vshrl.u32 %v1292, 7
    %v1294 = vsub.s32 %v1291, %v1293
    %v1295 = vrot.slane %v1281, %v1294
    %v1296 = vcombine.high %v1288, %v1288
    %v1297 = vcombine.high %v1295, %v1295
    %vm1306 = vcmask 1024
    %1307 = vst.msk [vmem:[%s6] sm:$0x3] %vm1306, %v1271
    %1308 = vst.msk [vmem:[%s6 + $0x2] sm:$0x3] %vm1306, %v1279
    %1309 = vst.msk [vmem:[%s6 + $0x4] sm:$0x3] %vm1306, %v1278
    %1310 = vst.msk [vmem:[%s6 + $0x6] sm:$0x3] %vm1306, %v1280
    %1311 = vst.msk [vmem:[%s6 + $0x8] sm:$0x3] %vm1306, %v1288
    %1312 = vst.msk [vmem:[%s6 + $0xa] sm:$0x3] %vm1306, %v1296
    %1313 = vst.msk [vmem:[%s6 + $0xc] sm:$0x3] %vm1306, %v1295
    %1314 = vst.msk [vmem:[%s6 + $0xe] sm:$0x3] %vm1306, %v1297
    // Predicated region
    $region34: #{tpu_custom_call.1} parent=1 // pred_check
      _
    $region35: #{tpu_custom_call.1} parent=1 // pred_check_branch
      %1316 = sbr.rel (0) target = $region37
    $region36: #{tpu_custom_call.1} parent=1 // pred_region
      _
    $region37: #{tpu_custom_call.1} parent=1 // pred_fallthru
      _
    // Predicated region
    $region38: #{tpu_custom_call.1} parent=1 // pred_check
      _
    $region39: #{tpu_custom_call.1} parent=1 // pred_check_branch
      %1318 = sbr.rel (0) target = $region41
    $region40: #{tpu_custom_call.1} parent=1 // pred_region
      _
    $region41: #{tpu_custom_call.1} parent=1 // pred_fallthru
      _
    %1319 = vsyncpa [#allocation5], 1
    %1320 = vsyncpa [#allocation7], 1

</llo_original>
